<compile_context>
chip_gen: v6e
topology: v6e:2x2x1
jax: 0.10.0
libtpu: 0.0.40
codegen_flags: <defaults>
</compile_context>

<pallas_src>
import jax
import jax.numpy as jnp
from jax.experimental import pallas as pl
from jax.experimental.pallas import tpu as pltpu

H1_PAD = 256   # fc1 output (160) padded to 2 lanes of 128
A_PAD = 128    # fc2 output (action_num) padded to one full lane tile
BIAS_LEN = 512 + 128 + H1_PAD + A_PAD   # = 1024, every segment 128-aligned


def _round_up(x, m):
    return (x + m - 1) // m * m


def actor_kernel(image_ref, outsider_ref,
                 w_img_ref, w_out_ref,
                 w1a_ref, w1b_ref, w2_ref,
                 bias_ref, o_ref):
    # f32 activations arrive straight from HBM; cast to bf16 in-kernel just
    # before the MXU dots.  All accumulation / elementwise math stays f32.
    img = image_ref[...].astype(jnp.bfloat16)     # [tB, 512]
    outs = outsider_ref[...].astype(jnp.bfloat16)  # [tB, 512]

    # Packed biases (f32); each segment starts on a 128-lane boundary.
    b_img = bias_ref[:, 0:512]       # [1, 512]
    b_out = bias_ref[:, 512:640]     # [1, 128]
    b1 = bias_ref[:, 640:896]        # [1, 256]
    b2 = bias_ref[:, 896:1024]       # [1, 128]  (-1e30 on padded action lanes)

    # fen_model(512, 512): Linear + ReLU   -> [tB, 512]
    img_feat = jnp.dot(img, w_img_ref[...],
                       preferred_element_type=jnp.float32) + b_img
    img_feat = jnp.maximum(img_feat, 0.0)

    # fen_model(512, 128): Linear + ReLU   -> [tB, 128]
    out_feat = jnp.dot(outs, w_out_ref[...],
                       preferred_element_type=jnp.float32) + b_out
    out_feat = jnp.maximum(out_feat, 0.0)

    # fc1 on concat([img_feat, out_feat], dim=1):
    #   concat([a, b]) @ W1 == a @ W1[:512] + b @ W1[512:640]
    h = (jnp.dot(img_feat.astype(jnp.bfloat16), w1a_ref[...],
                 preferred_element_type=jnp.float32)
         + jnp.dot(out_feat.astype(jnp.bfloat16), w1b_ref[...],
                   preferred_element_type=jnp.float32)
         + b1)
    h = jnp.maximum(h, 0.0)       # ReLU; Dropout(p=0.3) -> identity (eval).

    # fc2 -> padded logits [tB, 128]; padded lanes carry -1e30 bias -> prob 0.
    logits = jnp.dot(h.astype(jnp.bfloat16), w2_ref[...],
                     preferred_element_type=jnp.float32) + b2

    # softmax over dim=1 (padded lanes contribute exp() == 0).
    m = jnp.max(logits, axis=1, keepdims=True)
    e = jnp.exp(logits - m)
    denom = jnp.sum(e, axis=1, keepdims=True)
    o_ref[...] = e / denom        # exact normalization (rows sum to 1)


def actor_model_forward(image, outsider_piece, params, *, max_tile_b=1024):
    """image, outsider_piece: [B, 512] float32.  Returns softmax probs [B, A]."""
    B = image.shape[0]
    A = params["action_num"]

    if B < 16:
        # Tiny / latency-bound batch: one full-extent block (block dims equal
        # the array dims, so the (8, 128) rule is satisfied for any B).
        tile_b = B
    else:
        # >= 2 tiles so the "parallel" batch axis shards across both v7x
        # TensorCores; 8-row aligned for the (8, 128) block rule; capped at
        # max_tile_b so per-tile VMEM stays modest on every generation.
        tile_b = min(max_tile_b, _round_up(pl.cdiv(B, 2), 8))
    grid = (pl.cdiv(B, tile_b),)

    act_spec = pl.BlockSpec((tile_b, 512), lambda i: (i, 0))

    def resident(shape):
        # Same block for every grid step -> loaded once, stays in VMEM.
        return pl.BlockSpec(shape, lambda i: (0, 0))

    probs_padded = pl.pallas_call(
        actor_kernel,
        out_shape=jax.ShapeDtypeStruct((B, A_PAD), jnp.float32),
        grid=grid,
        in_specs=[
            act_spec, act_spec,
            resident((512, 512)),        # w_img (bf16)
            resident((512, 128)),        # w_out (bf16)
            resident((512, H1_PAD)),     # w1a   (bf16)
            resident((128, H1_PAD)),     # w1b   (bf16)
            resident((H1_PAD, A_PAD)),   # w2    (bf16)
            resident((1, BIAS_LEN)),     # packed biases (f32)
        ],
        out_specs=pl.BlockSpec((tile_b, A_PAD), lambda i: (i, 0)),
        compiler_params=pltpu.CompilerParams(
            dimension_semantics=("parallel",),
            vmem_limit_bytes=48 * 1024 * 1024),
    )(image, outsider_piece,
      params["w_img"], params["w_out"],
      params["w1a"], params["w1b"], params["w2"],
      params["bias"])

    return probs_padded[:, :A]


def init_params(key, action_num):
    """Deterministic synthetic parameters (PyTorch-default-like uniform init),
    pre-padded and pre-cast to the kernel's layout."""
    def linear(k, fan_in, fan_out):
        k1, k2 = jax.random.split(k)
        bound = 1.0 / jnp.sqrt(jnp.float32(fan_in))
        w = jax.random.uniform(k1, (fan_in, fan_out), jnp.float32, -bound, bound)
        b = jax.random.uniform(k2, (fan_out,), jnp.float32, -bound, bound)
        return w, b

    k_img, k_out, k_fc1, k_fc2 = jax.random.split(key, 4)
    w_img, b_img = linear(k_img, 512, 512)       # fen_model(512, 512)
    w_out, b_out = linear(k_out, 512, 128)       # fen_model(512, 128)
    w1, b1 = linear(k_fc1, 640, 160)             # fc1
    w2, b2 = linear(k_fc2, 160, action_num)      # fc2

    # Pad fc1 out 160 -> 256 (zeros), fc2 in 160 -> 256 (zeros),
    # fc2 out A -> 128 (zero weight columns, -1e30 bias => softmax prob 0).
    w1p = jnp.zeros((640, H1_PAD), jnp.float32).at[:, :160].set(w1)
    b1p = jnp.zeros((H1_PAD,), jnp.float32).at[:160].set(b1)
    w2p = jnp.zeros((H1_PAD, A_PAD), jnp.float32).at[:160, :action_num].set(w2)
    b2p = jnp.full((A_PAD,), -1e30, jnp.float32).at[:action_num].set(b2)

    bias_packed = jnp.concatenate([b_img, b_out, b1p, b2p]).reshape(1, BIAS_LEN)

    return {
        "action_num": action_num,
        "w_img": w_img.astype(jnp.bfloat16),
        "w_out": w_out.astype(jnp.bfloat16),
        "w1a": w1p[:512].astype(jnp.bfloat16),
        "w1b": w1p[512:].astype(jnp.bfloat16),
        "w2": w2p.astype(jnp.bfloat16),
        "bias": bias_packed,                      # f32 [1, 1024]
    }


def _reference_forward(image, outsider_piece, params):
    """Pure-JAX reference with the same bf16-weight / f32-accumulation recipe."""
    bias = params["bias"][0]
    x = image.astype(jnp.bfloat16)
    y = outsider_piece.astype(jnp.bfloat16)
    f1 = jnp.maximum(jnp.dot(x, params["w_img"],
                             preferred_element_type=jnp.float32) + bias[0:512], 0.0)
    f2 = jnp.maximum(jnp.dot(y, params["w_out"],
                             preferred_element_type=jnp.float32) + bias[512:640], 0.0)
    h = jnp.maximum(
        jnp.dot(f1.astype(jnp.bfloat16), params["w1a"],
                preferred_element_type=jnp.float32)
        + jnp.dot(f2.astype(jnp.bfloat16), params["w1b"],
                  preferred_element_type=jnp.float32)
        + bias[640:896], 0.0)
    logits = jnp.dot(h.astype(jnp.bfloat16), params["w2"],
                     preferred_element_type=jnp.float32) + bias[896:1024]
    return jax.nn.softmax(logits, axis=1)[:, :params["action_num"]]


if __name__ == "__main__":
    key = jax.random.PRNGKey(0)
    k_par, k_img, k_out = jax.random.split(key, 3)

    action_num = 8
    B = 2
    params = init_params(k_par, action_num)
    image = jax.random.normal(k_img, (B, 512), jnp.float32)
    outsider_piece = jax.random.normal(k_out, (B, 512), jnp.float32)

    probs = actor_model_forward(image, outsider_piece, params)
    probs = jax.block_until_ready(probs)
    expected = _reference_forward(image, outsider_piece, params)

    assert probs.shape == (B, action_num)
    assert bool(jnp.all(jnp.isfinite(probs)))
    assert bool(jnp.allclose(jnp.sum(probs, axis=1), 1.0, atol=1e-3))
    assert bool(jnp.allclose(probs, expected, atol=5e-3))
    print("KERNEL_OK")
</pallas_src>

<mosaic_0001>
module attributes {stable_mosaic.version = 11 : i64} {
  func.func @actor_kernel(%arg0: i32, %arg1: memref<2x512xf32, #tpu.memory_space<vmem>>, %arg2: memref<2x512xf32, #tpu.memory_space<vmem>>, %arg3: memref<512x512xbf16, #tpu.memory_space<vmem>>, %arg4: memref<512x128xbf16, #tpu.memory_space<vmem>>, %arg5: memref<512x256xbf16, #tpu.memory_space<vmem>>, %arg6: memref<128x256xbf16, #tpu.memory_space<vmem>>, %arg7: memref<256x128xbf16, #tpu.memory_space<vmem>>, %arg8: memref<1x1024xf32, #tpu.memory_space<vmem>>, %arg9: memref<2x128xf32, #tpu.memory_space<vmem>>) attributes {dimension_semantics = [#tpu.dimension_semantics<parallel>], iteration_bounds = array<i64: 1>, scalar_prefetch = 0 : i64, scratch_operands = 0 : i64, tpu.core_type = #tpu.core_type<tc>, window_params = [{transform_indices = @transform_0, window_bounds = array<i64: 2, 512>}, {transform_indices = @transform_1, window_bounds = array<i64: 2, 512>}, {pipeline_mode = #tpu.pipeline_mode<synchronous>, transform_indices = @transform_2, window_bounds = array<i64: 512, 512>}, {pipeline_mode = #tpu.pipeline_mode<synchronous>, transform_indices = @transform_3, window_bounds = array<i64: 512, 128>}, {pipeline_mode = #tpu.pipeline_mode<synchronous>, transform_indices = @transform_4, window_bounds = array<i64: 512, 256>}, {pipeline_mode = #tpu.pipeline_mode<synchronous>, transform_indices = @transform_5, window_bounds = array<i64: 128, 256>}, {pipeline_mode = #tpu.pipeline_mode<synchronous>, transform_indices = @transform_6, window_bounds = array<i64: 256, 128>}, {pipeline_mode = #tpu.pipeline_mode<synchronous>, transform_indices = @transform_7, window_bounds = array<i64: 1, 1024>}, {transform_indices = @transform_8, window_bounds = array<i64: 2, 128>}]} {
    %c0 = arith.constant 0 : index
    %c0_0 = arith.constant 0 : index
    %0 = vector.load %arg1[%c0, %c0_0] : memref<2x512xf32, #tpu.memory_space<vmem>>, vector<2x512xf32>
    %1 = arith.truncf %0 : vector<2x512xf32> to vector<2x512xbf16>
    %c0_1 = arith.constant 0 : index
    %c0_2 = arith.constant 0 : index
    %2 = vector.load %arg2[%c0_1, %c0_2] : memref<2x512xf32, #tpu.memory_space<vmem>>, vector<2x512xf32>
    %3 = arith.truncf %2 : vector<2x512xf32> to vector<2x512xbf16>
    %c0_3 = arith.constant 0 : index
    %c0_4 = arith.constant 0 : index
    %4 = vector.load %arg8[%c0_3, %c0_4] : memref<1x1024xf32, #tpu.memory_space<vmem>>, vector<1x512xf32>
    %c0_5 = arith.constant 0 : index
    %c512 = arith.constant 512 : index
    %5 = vector.load %arg8[%c0_5, %c512] : memref<1x1024xf32, #tpu.memory_space<vmem>>, vector<1x128xf32>
    %c0_6 = arith.constant 0 : index
    %c640 = arith.constant 640 : index
    %6 = vector.load %arg8[%c0_6, %c640] : memref<1x1024xf32, #tpu.memory_space<vmem>>, vector<1x256xf32>
    %c0_7 = arith.constant 0 : index
    %c896 = arith.constant 896 : index
    %7 = vector.load %arg8[%c0_7, %c896] : memref<1x1024xf32, #tpu.memory_space<vmem>>, vector<1x128xf32>
    %c0_8 = arith.constant 0 : index
    %c0_9 = arith.constant 0 : index
    %8 = vector.load %arg3[%c0_8, %c0_9] : memref<512x512xbf16, #tpu.memory_space<vmem>>, vector<512x512xbf16>
    %cst = arith.constant dense<0.000000e+00> : vector<2x512xf32>
    %9 = tpu.matmul %1, %8, %cst {dimension_numbers = #tpu.dot_dimension_numbers<[1], [0], [0], [1], [0, 0, 1, 1], [], []>} : vector<2x512xbf16>, vector<512x512xbf16>, vector<2x512xf32> -> vector<2x512xf32>
    %10 = vector.broadcast %4 : vector<1x512xf32> to vector<2x512xf32>
    %11 = arith.addf %9, %10 : vector<2x512xf32>
    %cst_10 = arith.constant 0.000000e+00 : f32
    %12 = vector.broadcast %cst_10 : f32 to vector<2x512xf32>
    %13 = arith.maximumf %11, %12 : vector<2x512xf32>
    %c0_11 = arith.constant 0 : index
    %c0_12 = arith.constant 0 : index
    %14 = vector.load %arg4[%c0_11, %c0_12] : memref<512x128xbf16, #tpu.memory_space<vmem>>, vector<512x128xbf16>
    %cst_13 = arith.constant dense<0.000000e+00> : vector<2x128xf32>
    %15 = tpu.matmul %3, %14, %cst_13 {dimension_numbers = #tpu.dot_dimension_numbers<[1], [0], [0], [1], [0, 0, 1, 1], [], []>} : vector<2x512xbf16>, vector<512x128xbf16>, vector<2x128xf32> -> vector<2x128xf32>
    %16 = vector.broadcast %5 : vector<1x128xf32> to vector<2x128xf32>
    %17 = arith.addf %15, %16 : vector<2x128xf32>
    %cst_14 = arith.constant 0.000000e+00 : f32
    %18 = vector.broadcast %cst_14 : f32 to vector<2x128xf32>
    %19 = arith.maximumf %17, %18 : vector<2x128xf32>
    %20 = arith.truncf %13 : vector<2x512xf32> to vector<2x512xbf16>
    %c0_15 = arith.constant 0 : index
    %c0_16 = arith.constant 0 : index
    %21 = vector.load %arg5[%c0_15, %c0_16] : memref<512x256xbf16, #tpu.memory_space<vmem>>, vector<512x256xbf16>
    %cst_17 = arith.constant dense<0.000000e+00> : vector<2x256xf32>
    %22 = tpu.matmul %20, %21, %cst_17 {dimension_numbers = #tpu.dot_dimension_numbers<[1], [0], [0], [1], [0, 0, 1, 1], [], []>} : vector<2x512xbf16>, vector<512x256xbf16>, vector<2x256xf32> -> vector<2x256xf32>
    %23 = arith.truncf %19 : vector<2x128xf32> to vector<2x128xbf16>
    %c0_18 = arith.constant 0 : index
    %c0_19 = arith.constant 0 : index
    %24 = vector.load %arg6[%c0_18, %c0_19] : memref<128x256xbf16, #tpu.memory_space<vmem>>, vector<128x256xbf16>
    %cst_20 = arith.constant dense<0.000000e+00> : vector<2x256xf32>
    %25 = tpu.matmul %23, %24, %cst_20 {dimension_numbers = #tpu.dot_dimension_numbers<[1], [0], [0], [1], [0, 0, 1, 1], [], []>} : vector<2x128xbf16>, vector<128x256xbf16>, vector<2x256xf32> -> vector<2x256xf32>
    %26 = arith.addf %22, %25 : vector<2x256xf32>
    %27 = vector.broadcast %6 : vector<1x256xf32> to vector<2x256xf32>
    %28 = arith.addf %26, %27 : vector<2x256xf32>
    %cst_21 = arith.constant 0.000000e+00 : f32
    %29 = vector.broadcast %cst_21 : f32 to vector<2x256xf32>
    %30 = arith.maximumf %28, %29 : vector<2x256xf32>
    %31 = arith.truncf %30 : vector<2x256xf32> to vector<2x256xbf16>
    %c0_22 = arith.constant 0 : index
    %c0_23 = arith.constant 0 : index
    %32 = vector.load %arg7[%c0_22, %c0_23] : memref<256x128xbf16, #tpu.memory_space<vmem>>, vector<256x128xbf16>
    %cst_24 = arith.constant dense<0.000000e+00> : vector<2x128xf32>
    %33 = tpu.matmul %31, %32, %cst_24 {dimension_numbers = #tpu.dot_dimension_numbers<[1], [0], [0], [1], [0, 0, 1, 1], [], []>} : vector<2x256xbf16>, vector<256x128xbf16>, vector<2x128xf32> -> vector<2x128xf32>
    %34 = vector.broadcast %7 : vector<1x128xf32> to vector<2x128xf32>
    %35 = arith.addf %33, %34 : vector<2x128xf32>
    %cst_25 = arith.constant dense<0xFF800000> : vector<2xf32>
    %36 = vector.multi_reduction <maximumf>, %35, %cst_25 [1] : vector<2x128xf32> to vector<2xf32>
    %37 = vector.shape_cast %36 : vector<2xf32> to vector<2x1xf32>
    %38 = vector.broadcast %37 : vector<2x1xf32> to vector<2x128xf32>
    %39 = arith.subf %35, %38 : vector<2x128xf32>
    %40 = math.exp %39 : vector<2x128xf32>
    %cst_26 = arith.constant dense<0.000000e+00> : vector<2xf32>
    %41 = vector.multi_reduction <add>, %40, %cst_26 [1] : vector<2x128xf32> to vector<2xf32>
    %42 = vector.shape_cast %41 : vector<2xf32> to vector<2x1xf32>
    %43 = vector.broadcast %42 : vector<2x1xf32> to vector<2x128xf32>
    %44 = arith.divf %40, %43 : vector<2x128xf32>
    %c0_27 = arith.constant 0 : index
    %c0_28 = arith.constant 0 : index
    %45 = vector.load %arg9[%c0_27, %c0_28] : memref<2x128xf32, #tpu.memory_space<vmem>>, vector<2x128xf32>
    tpu.vector_store %arg9[%c0_27, %c0_28], %44 {strides = array<i32>} : memref<2x128xf32, #tpu.memory_space<vmem>>, vector<2x128xf32>,
    return
  }
  func.func @transform_0(%arg0: i32) -> (i32, i32) {
    %c0_i32 = arith.constant 0 : i32
    %c0_i32_0 = arith.constant 0 : i32
    return %arg0, %c0_i32 : i32, i32
  }
  func.func @transform_1(%arg0: i32) -> (i32, i32) {
    %c0_i32 = arith.constant 0 : i32
    %c0_i32_0 = arith.constant 0 : i32
    return %arg0, %c0_i32 : i32, i32
  }
  func.func @transform_2(%arg0: i32) -> (i32, i32) {
    %c0_i32 = arith.constant 0 : i32
    %c0_i32_0 = arith.constant 0 : i32
    %c0_i32_1 = arith.constant 0 : i32
    return %c0_i32, %c0_i32_0 : i32, i32
  }
  func.func @transform_3(%arg0: i32) -> (i32, i32) {
    %c0_i32 = arith.constant 0 : i32
    %c0_i32_0 = arith.constant 0 : i32
    %c0_i32_1 = arith.constant 0 : i32
    return %c0_i32, %c0_i32_0 : i32, i32
  }
  func.func @transform_4(%arg0: i32) -> (i32, i32) {
    %c0_i32 = arith.constant 0 : i32
    %c0_i32_0 = arith.constant 0 : i32
    %c0_i32_1 = arith.constant 0 : i32
    return %c0_i32, %c0_i32_0 : i32, i32
  }
  func.func @transform_5(%arg0: i32) -> (i32, i32) {
    %c0_i32 = arith.constant 0 : i32
    %c0_i32_0 = arith.constant 0 : i32
    %c0_i32_1 = arith.constant 0 : i32
    return %c0_i32, %c0_i32_0 : i32, i32
  }
  func.func @transform_6(%arg0: i32) -> (i32, i32) {
    %c0_i32 = arith.constant 0 : i32
    %c0_i32_0 = arith.constant 0 : i32
    %c0_i32_1 = arith.constant 0 : i32
    return %c0_i32, %c0_i32_0 : i32, i32
  }
  func.func @transform_7(%arg0: i32) -> (i32, i32) {
    %c0_i32 = arith.constant 0 : i32
    %c0_i32_0 = arith.constant 0 : i32
    %c0_i32_1 = arith.constant 0 : i32
    return %c0_i32, %c0_i32_0 : i32, i32
  }
  func.func @transform_8(%arg0: i32) -> (i32, i32) {
    %c0_i32 = arith.constant 0 : i32
    %c0_i32_0 = arith.constant 0 : i32
    return %arg0, %c0_i32 : i32, i32
  }
}

</mosaic_0001>

<llo_original>
// kernel: tpu_custom_call.1
$region0: #{tpu_custom_call.1}
  #allocation0 [shape = 'u32[]', space=smem, size = 0x4, offset = 0x4, fixed_abs, tag = 'smem constant byte address 0x4 - core index']
  #allocation1 [shape = 'u32[144,128]{1,0:T(1,128)}', space=vmem, size = 0x12000, scoped, tag = 'internal scratch']
  %s0 = inlined_call_operand.hbm [shape: f32[2,512], index: 0, kind: input, shape index: {}]
  %s1 = inlined_call_operand.hbm [shape: f32[2,512], index: 1, kind: input, shape index: {}]
  %s2 = inlined_call_operand.hbm [shape: bf16[512,512], index: 2, kind: input, shape index: {}]
  %s3 = inlined_call_operand.hbm [shape: bf16[512,128], index: 3, kind: input, shape index: {}]
  %s4 = inlined_call_operand.hbm [shape: bf16[512,256], index: 4, kind: input, shape index: {}]
  %s5 = inlined_call_operand.hbm [shape: bf16[128,256], index: 5, kind: input, shape index: {}]
  %s6 = inlined_call_operand.hbm [shape: bf16[256,128], index: 6, kind: input, shape index: {}]
  %s7 = inlined_call_operand.vmem [shape: f32[1,1024], index: 7, kind: input, shape index: {}]
  %s8 = inlined_call_operand.hbm [shape: f32[2,128], index: 8, kind: output, shape index: {}]
  %s9 = sld [smem:[#allocation0]]
  $region70: #{tpu_custom_call.1} parent=0
    _
  %s11 = ssub.s32 1, %s9
  %s12 = scalar_select 0, %s11, %s9
  $region1: #{tpu_custom_call.1} parent=0
    #allocation2 [shape = 'u8[4096]{0}', space=vmem, size = 0x1000, scoped, tag = 'input window, operand 0, single buffered']
    #allocation3 [shape = 's32[1]{0}', space=sflag, size = 0x4, scoped, tag = 'scoped memory for tpu_custom_call.1']
    #allocation4 [shape = 's32[1]{0}', space=sflag, size = 0x4, scoped, tag = 'scoped memory for tpu_custom_call.1']
    #allocation5 [shape = 'u8[4096]{0}', space=vmem, size = 0x1000, scoped, tag = 'input window, operand 1, single buffered']
    #allocation6 [shape = 's32[1]{0}', space=sflag, size = 0x4, scoped, tag = 'scoped memory for tpu_custom_call.1']
    #allocation7 [shape = 'u8[524288]{0}', space=vmem, size = 0x80000, scoped, tag = 'input window, operand 2, single buffered']
    #allocation8 [shape = 'u8[131072]{0}', space=vmem, size = 0x20000, scoped, tag = 'input window, operand 3, single buffered']
    #allocation9 [shape = 's32[1]{0}', space=sflag, size = 0x4, scoped, tag = 'scoped memory for tpu_custom_call.1']
    #allocation10 [shape = 'u8[262144]{0}', space=vmem, size = 0x40000, scoped, tag = 'input window, operand 4, single buffered']
    #allocation11 [shape = 'u8[65536]{0}', space=vmem, size = 0x10000, scoped, tag = 'input window, operand 5, single buffered']
    #allocation12 [shape = 's32[1]{0}', space=sflag, size = 0x4, scoped, tag = 'scoped memory for tpu_custom_call.1']
    #allocation13 [shape = 'u8[65536]{0}', space=vmem, size = 0x10000, scoped, tag = 'input window, operand 6, single buffered']
    #allocation14 [shape = 'u8[1024]{0}', space=vmem, size = 0x400, scoped, tag = 'output window, operand 0, single buffered']
    %13 = vsyncpa [#allocation3], 0
    %14 = vsyncpa [#allocation6], 0
    %15 = vsyncpa [#allocation9], 0
    %16 = vsyncpa [#allocation12], 0
    %17 = vsyncpa [#allocation4], 0
    // Predicated region
    $region2: #{tpu_custom_call.1} parent=1 // pred_check
      _
    $region3: #{tpu_custom_call.1} parent=1 // pred_check_branch
      %19 = sbr.rel (0) target = $region5
    $region4: #{tpu_custom_call.1} parent=1 // pred_region
      %s21 = ssub.s32 128, 128
      %22 = vsyncadd [#allocation3], %s21
      %s24 = sshll.u32 [#allocation2], 4
      %s25 = int_to_ptr.vmem [resolvable:$true] %s24
      %27 = dma.hbm_to_vmem [thread:$0]  %s0, 128, %s25, [#allocation3]
    $region5: #{tpu_custom_call.1} parent=1 // pred_fallthru
      _
    // Predicated region
    $region6: #{tpu_custom_call.1} parent=1 // pred_check
      _
    $region7: #{tpu_custom_call.1} parent=1 // pred_check_branch
      %29 = sbr.rel (0) target = $region9
    $region8: #{tpu_custom_call.1} parent=1 // pred_region
      %s31 = ssub.s32 128, 128
      %32 = vsyncadd [#allocation6], %s31
      %s34 = sshll.u32 [#allocation5], 4
      %s35 = int_to_ptr.vmem [resolvable:$true] %s34
      %37 = dma.hbm_to_vmem [thread:$0]  %s1, 128, %s35, [#allocation6]
    $region9: #{tpu_custom_call.1} parent=1 // pred_fallthru
      _
    // Predicated region
    $region10: #{tpu_custom_call.1} parent=1 // pred_check
      _
    $region11: #{tpu_custom_call.1} parent=1 // pred_check_branch
      %39 = sbr.rel (0) target = $region13
    $region12: #{tpu_custom_call.1} parent=1 // pred_region
      %s41 = ssub.s32 16384, 16384
      %42 = vsyncadd [#allocation6], %s41
      %s43 = sshll.u32 [#allocation7], 4
      %s44 = int_to_ptr.vmem [resolvable:$true] %s43
      %49 = dma.hbm_to_vmem [thread:$0]  %s2, 16384, %s44, [#allocation6], 256, 256, 16
    $region13: #{tpu_custom_call.1} parent=1 // pred_fallthru
      _
    // Predicated region
    $region14: #{tpu_custom_call.1} parent=1 // pred_check
      _
    $region15: #{tpu_custom_call.1} parent=1 // pred_check_branch
      %51 = sbr.rel (0) target = $region17
    $region16: #{tpu_custom_call.1} parent=1 // pred_region
      %s53 = ssub.s32 4096, 4096
      %54 = vsyncadd [#allocation9], %s53
      %s55 = sshll.u32 [#allocation8], 4
      %s56 = int_to_ptr.vmem [resolvable:$true] %s55
      %61 = dma.hbm_to_vmem [thread:$0]  %s3, 4096, %s56, [#allocation9], 64, 64, 4
    $region17: #{tpu_custom_call.1} parent=1 // pred_fallthru
      _
    // Predicated region
    $region18: #{tpu_custom_call.1} parent=1 // pred_check
      _
    $region19: #{tpu_custom_call.1} parent=1 // pred_check_branch
      %63 = sbr.rel (0) target = $region21
    $region20: #{tpu_custom_call.1} parent=1 // pred_region
      %s65 = ssub.s32 8192, 8192
      %66 = vsyncadd [#allocation9], %s65
      %s67 = sshll.u32 [#allocation10], 4
      %s68 = int_to_ptr.vmem [resolvable:$true] %s67
      %73 = dma.hbm_to_vmem [thread:$0]  %s4, 8192, %s68, [#allocation9], 128, 128, 8
    $region21: #{tpu_custom_call.1} parent=1 // pred_fallthru
      _
    // Predicated region
    $region22: #{tpu_custom_call.1} parent=1 // pred_check
      _
    $region23: #{tpu_custom_call.1} parent=1 // pred_check_branch
      %75 = sbr.rel (0) target = $region25
    $region24: #{tpu_custom_call.1} parent=1 // pred_region
      %s77 = ssub.s32 2048, 2048
      %78 = vsyncadd [#allocation12], %s77
      %s79 = sshll.u32 [#allocation11], 4
      %s80 = int_to_ptr.vmem [resolvable:$true] %s79
      %85 = dma.hbm_to_vmem [thread:$0]  %s5, 2048, %s80, [#allocation12], 128, 128, 8
    $region25: #{tpu_custom_call.1} parent=1 // pred_fallthru
      _
    // Predicated region
    $region26: #{tpu_custom_call.1} parent=1 // pred_check
      _
    $region27: #{tpu_custom_call.1} parent=1 // pred_check_branch
      %87 = sbr.rel (0) target = $region29
    $region28: #{tpu_custom_call.1} parent=1 // pred_region
      %s89 = ssub.s32 2048, 2048
      %90 = vsyncadd [#allocation12], %s89
      %s91 = sshll.u32 [#allocation13], 4
      %s92 = int_to_ptr.vmem [resolvable:$true] %s91
      %97 = dma.hbm_to_vmem [thread:$0]  %s6, 2048, %s92, [#allocation12], 64, 64, 4
    $region29: #{tpu_custom_call.1} parent=1 // pred_fallthru
      _
    // Predicated region
    $region30: #{tpu_custom_call.1} parent=1 // pred_check
      _
    $region31: #{tpu_custom_call.1} parent=1 // pred_check_branch
      %99 = sbr.rel (0) target = $region33
    $region32: #{tpu_custom_call.1} parent=1 // pred_region
      _
    $region33: #{tpu_custom_call.1} parent=1 // pred_fallthru
      _
    // Predicated region
    $region34: #{tpu_custom_call.1} parent=1 // pred_check
      _
    $region35: #{tpu_custom_call.1} parent=1 // pred_check_branch
      %101 = sbr.rel (0) target = $region37
    $region36: #{tpu_custom_call.1} parent=1 // pred_region
      %102 = dma.done [#allocation3], 128
    $region37: #{tpu_custom_call.1} parent=1 // pred_fallthru
      _
    // Predicated region
    $region38: #{tpu_custom_call.1} parent=1 // pred_check
      _
    $region39: #{tpu_custom_call.1} parent=1 // pred_check_branch
      %104 = sbr.rel (0) target = $region41
    $region40: #{tpu_custom_call.1} parent=1 // pred_region
      %105 = dma.done [#allocation6], 128
    $region41: #{tpu_custom_call.1} parent=1 // pred_fallthru
      _
    // Predicated region
    $region42: #{tpu_custom_call.1} parent=1 // pred_check
      _
    $region43: #{tpu_custom_call.1} parent=1 // pred_check_branch
      %107 = sbr.rel (0) target = $region45
    $region44: #{tpu_custom_call.1} parent=1 // pred_region
      %108 = dma.done [#allocation6], 16384
    $region45: #{tpu_custom_call.1} parent=1 // pred_fallthru
      _
    // Predicated region
    $region46: #{tpu_custom_call.1} parent=1 // pred_check
      _
    $region47: #{tpu_custom_call.1} parent=1 // pred_check_branch
      %110 = sbr.rel (0) target = $region49
    $region48: #{tpu_custom_call.1} parent=1 // pred_region
      %111 = dma.done [#allocation9], 4096
    $region49: #{tpu_custom_call.1} parent=1 // pred_fallthru
      _
    // Predicated region
    $region50: #{tpu_custom_call.1} parent=1 // pred_check
      _
    $region51: #{tpu_custom_call.1} parent=1 // pred_check_branch
      %113 = sbr.rel (0) target = $region53
    $region52: #{tpu_custom_call.1} parent=1 // pred_region
      %114 = dma.done [#allocation9], 8192
    $region53: #{tpu_custom_call.1} parent=1 // pred_fallthru
      _
    // Predicated region
    $region54: #{tpu_custom_call.1} parent=1 // pred_check
      _
    $region55: #{tpu_custom_call.1} parent=1 // pred_check_branch
      %116 = sbr.rel (0) target = $region57
    $region56: #{tpu_custom_call.1} parent=1 // pred_region
      %117 = dma.done [#allocation12], 2048
    $region57: #{tpu_custom_call.1} parent=1 // pred_fallthru
      _
    // Predicated region
    $region58: #{tpu_custom_call.1} parent=1 // pred_check
      _
    $region59: #{tpu_custom_call.1} parent=1 // pred_check_branch
      %119 = sbr.rel (0) target = $region61
    $region60: #{tpu_custom_call.1} parent=1 // pred_region
      %120 = dma.done [#allocation12], 2048
    $region61: #{tpu_custom_call.1} parent=1 // pred_fallthru
      _
    %v122 = vld [vmem:[#allocation2] sm:$0xff]
    %v124 = vcombine.high %v122, %v122
    %v126 = vunpack.c.l.s4 1983009808
    %v127 = vunpack.c.0.s8 %v126
    %v128 = vlaneseq
    %v129 = vshrl.u32 %v128, 7
    %v130 = vsub.s32 %v127, %v129
    %v131 = vrot.slane %v122, %v130
    %v133 = vunpack.c.l.s4 1983009808
    %v134 = vunpack.c.0.s8 %v133
    %v135 = vlaneseq
    %v136 = vshrl.u32 %v135, 7
    %v137 = vsub.s32 %v134, %v136
    %v138 = vrot.slane %v124, %v137
    %v139 = vcombine.high %v131, %v131
    %v140 = vcombine.high %v138, %v138
    %v145 = vpack.c.bf16 %v131, %v131
    %v146 = vpack.c.bf16 %v139, %v139
    %v147 = vpack.c.bf16 %v138, %v138
    %v148 = vpack.c.bf16 %v140, %v140
    %v149 = vld [vmem:[#allocation5] sm:$0xff]
    %v151 = vcombine.high %v149, %v149
    %v153 = vunpack.c.l.s4 1983009808
    %v154 = vunpack.c.0.s8 %v153
    %v155 = vlaneseq
    %v156 = vshrl.u32 %v155, 7
    %v157 = vsub.s32 %v154, %v156
    %v158 = vrot.slane %v149, %v157
    %v160 = vunpack.c.l.s4 1983009808
    %v161 = vunpack.c.0.s8 %v160
    %v162 = vlaneseq
    %v163 = vshrl.u32 %v162, 7
    %v164 = vsub.s32 %v161, %v163
    %v165 = vrot.slane %v151, %v164
    %v166 = vcombine.high %v158, %v158
    %v167 = vcombine.high %v165, %v165
    %v172 = vpack.c.bf16 %v158, %v158
    %v173 = vpack.c.bf16 %v166, %v166
    %v174 = vpack.c.bf16 %v165, %v165
    %v175 = vpack.c.bf16 %v167, %v167
    %v176 = vld [vmem:[%s7] sm:$0xf]
    %v177 = vld [vmem:[%s7 + $0x4] sm:$0x1]
    %v178 = vld [vmem:[%s7 + $0x5] sm:$0x3]
    %v179 = vld [vmem:[%s7 + $0x7] sm:$0x1]
    %v180 = vld [vmem:[#allocation7] sm:$0xff]
    %v181 = vld [vmem:[#allocation7 + $0x8] sm:$0xff]
    %v182 = vld [vmem:[#allocation7 + $0x10] sm:$0xff]
    %v183 = vld [vmem:[#allocation7 + $0x18] sm:$0xff]
    %v184 = vld [vmem:[#allocation7 + $0x20] sm:$0xff]
    %v185 = vld [vmem:[#allocation7 + $0x28] sm:$0xff]
    %v186 = vld [vmem:[#allocation7 + $0x30] sm:$0xff]
    %v187 = vld [vmem:[#allocation7 + $0x38] sm:$0xff]
    %v188 = vld [vmem:[#allocation7 + $0x40] sm:$0xff]
    %v189 = vld [vmem:[#allocation7 + $0x48] sm:$0xff]
    %v190 = vld [vmem:[#allocation7 + $0x50] sm:$0xff]
    %v191 = vld [vmem:[#allocation7 + $0x58] sm:$0xff]
    %v192 = vld [vmem:[#allocation7 + $0x60] sm:$0xff]
    %v193 = vld [vmem:[#allocation7 + $0x68] sm:$0xff]
    %v194 = vld [vmem:[#allocation7 + $0x70] sm:$0xff]
    %v195 = vld [vmem:[#allocation7 + $0x78] sm:$0xff]
    %v196 = vld [vmem:[#allocation7 + $0x80] sm:$0xff]
    %v197 = vld [vmem:[#allocation7 + $0x88] sm:$0xff]
    %v198 = vld [vmem:[#allocation7 + $0x90] sm:$0xff]
    %v199 = vld [vmem:[#allocation7 + $0x98] sm:$0xff]
    %v200 = vld [vmem:[#allocation7 + $0xa0] sm:$0xff]
    %v201 = vld [vmem:[#allocation7 + $0xa8] sm:$0xff]
    %v202 = vld [vmem:[#allocation7 + $0xb0] sm:$0xff]
    %v203 = vld [vmem:[#allocation7 + $0xb8] sm:$0xff]
    %v204 = vld [vmem:[#allocation7 + $0xc0] sm:$0xff]
    %v205 = vld [vmem:[#allocation7 + $0xc8] sm:$0xff]
    %v206 = vld [vmem:[#allocation7 + $0xd0] sm:$0xff]
    %v207 = vld [vmem:[#allocation7 + $0xd8] sm:$0xff]
    %v208 = vld [vmem:[#allocation7 + $0xe0] sm:$0xff]
    %v209 = vld [vmem:[#allocation7 + $0xe8] sm:$0xff]
    %v210 = vld [vmem:[#allocation7 + $0xf0] sm:$0xff]
    %v211 = vld [vmem:[#allocation7 + $0xf8] sm:$0xff]
    %v212 = vld [vmem:[#allocation7 + $0x100] sm:$0xff]
    %v213 = vld [vmem:[#allocation7 + $0x108] sm:$0xff]
    %v214 = vld [vmem:[#allocation7 + $0x110] sm:$0xff]
    %v215 = vld [vmem:[#allocation7 + $0x118] sm:$0xff]
    %v216 = vld [vmem:[#allocation7 + $0x120] sm:$0xff]
    %v217 = vld [vmem:[#allocation7 + $0x128] sm:$0xff]
    %v218 = vld [vmem:[#allocation7 + $0x130] sm:$0xff]
    %v219 = vld [vmem:[#allocation7 + $0x138] sm:$0xff]
    %v220 = vld [vmem:[#allocation7 + $0x140] sm:$0xff]
    %v221 = vld [vmem:[#allocation7 + $0x148] sm:$0xff]
    %v222 = vld [vmem:[#allocation7 + $0x150] sm:$0xff]
    %v223 = vld [vmem:[#allocation7 + $0x158] sm:$0xff]
    %v224 = vld [vmem:[#allocation7 + $0x160] sm:$0xff]
    %v225 = vld [vmem:[#allocation7 + $0x168] sm:$0xff]
    %v226 = vld [vmem:[#allocation7 + $0x170] sm:$0xff]
    %v227 = vld [vmem:[#allocation7 + $0x178] sm:$0xff]
    %v228 = vld [vmem:[#allocation7 + $0x180] sm:$0xff]
    %v229 = vld [vmem:[#allocation7 + $0x188] sm:$0xff]
    %v230 = vld [vmem:[#allocation7 + $0x190] sm:$0xff]
    %v231 = vld [vmem:[#allocation7 + $0x198] sm:$0xff]
    %v232 = vld [vmem:[#allocation7 + $0x1a0] sm:$0xff]
    %v233 = vld [vmem:[#allocation7 + $0x1a8] sm:$0xff]
    %v234 = vld [vmem:[#allocation7 + $0x1b0] sm:$0xff]
    %v235 = vld [vmem:[#allocation7 + $0x1b8] sm:$0xff]
    %v236 = vld [vmem:[#allocation7 + $0x1c0] sm:$0xff]
    %v237 = vld [vmem:[#allocation7 + $0x1c8] sm:$0xff]
    %v238 = vld [vmem:[#allocation7 + $0x1d0] sm:$0xff]
    %v239 = vld [vmem:[#allocation7 + $0x1d8] sm:$0xff]
    %v240 = vld [vmem:[#allocation7 + $0x1e0] sm:$0xff]
    %v241 = vld [vmem:[#allocation7 + $0x1e8] sm:$0xff]
    %v242 = vld [vmem:[#allocation7 + $0x1f0] sm:$0xff]
    %v243 = vld [vmem:[#allocation7 + $0x1f8] sm:$0xff]
    %v244 = vld [vmem:[#allocation7 + $0x200] sm:$0xff]
    %v245 = vld [vmem:[#allocation7 + $0x208] sm:$0xff]
    %v246 = vld [vmem:[#allocation7 + $0x210] sm:$0xff]
    %v247 = vld [vmem:[#allocation7 + $0x218] sm:$0xff]
    %v248 = vld [vmem:[#allocation7 + $0x220] sm:$0xff]
    %v249 = vld [vmem:[#allocation7 + $0x228] sm:$0xff]
    %v250 = vld [vmem:[#allocation7 + $0x230] sm:$0xff]
    %v251 = vld [vmem:[#allocation7 + $0x238] sm:$0xff]
    %v252 = vld [vmem:[#allocation7 + $0x240] sm:$0xff]
    %v253 = vld [vmem:[#allocation7 + $0x248] sm:$0xff]
    %v254 = vld [vmem:[#allocation7 + $0x250] sm:$0xff]
    %v255 = vld [vmem:[#allocation7 + $0x258] sm:$0xff]
    %v256 = vld [vmem:[#allocation7 + $0x260] sm:$0xff]
    %v257 = vld [vmem:[#allocation7 + $0x268] sm:$0xff]
    %v258 = vld [vmem:[#allocation7 + $0x270] sm:$0xff]
    %v259 = vld [vmem:[#allocation7 + $0x278] sm:$0xff]
    %v260 = vld [vmem:[#allocation7 + $0x280] sm:$0xff]
    %v261 = vld [vmem:[#allocation7 + $0x288] sm:$0xff]
    %v262 = vld [vmem:[#allocation7 + $0x290] sm:$0xff]
    %v263 = vld [vmem:[#allocation7 + $0x298] sm:$0xff]
    %v264 = vld [vmem:[#allocation7 + $0x2a0] sm:$0xff]
    %v265 = vld [vmem:[#allocation7 + $0x2a8] sm:$0xff]
    %v266 = vld [vmem:[#allocation7 + $0x2b0] sm:$0xff]
    %v267 = vld [vmem:[#allocation7 + $0x2b8] sm:$0xff]
    %v268 = vld [vmem:[#allocation7 + $0x2c0] sm:$0xff]
    %v269 = vld [vmem:[#allocation7 + $0x2c8] sm:$0xff]
    %v270 = vld [vmem:[#allocation7 + $0x2d0] sm:$0xff]
    %v271 = vld [vmem:[#allocation7 + $0x2d8] sm:$0xff]
    %v272 = vld [vmem:[#allocation7 + $0x2e0] sm:$0xff]
    %v273 = vld [vmem:[#allocation7 + $0x2e8] sm:$0xff]
    %v274 = vld [vmem:[#allocation7 + $0x2f0] sm:$0xff]
    %v275 = vld [vmem:[#allocation7 + $0x2f8] sm:$0xff]
    %v276 = vld [vmem:[#allocation7 + $0x300] sm:$0xff]
    %v277 = vld [vmem:[#allocation7 + $0x308] sm:$0xff]
    %v278 = vld [vmem:[#allocation7 + $0x310] sm:$0xff]
    %v279 = vld [vmem:[#allocation7 + $0x318] sm:$0xff]
    %v280 = vld [vmem:[#allocation7 + $0x320] sm:$0xff]
    %v281 = vld [vmem:[#allocation7 + $0x328] sm:$0xff]
    %v282 = vld [vmem:[#allocation7 + $0x330] sm:$0xff]
    %v283 = vld [vmem:[#allocation7 + $0x338] sm:$0xff]
    %v284 = vld [vmem:[#allocation7 + $0x340] sm:$0xff]
    %v285 = vld [vmem:[#allocation7 + $0x348] sm:$0xff]
    %v286 = vld [vmem:[#allocation7 + $0x350] sm:$0xff]
    %v287 = vld [vmem:[#allocation7 + $0x358] sm:$0xff]
    %v288 = vld [vmem:[#allocation7 + $0x360] sm:$0xff]
    %v289 = vld [vmem:[#allocation7 + $0x368] sm:$0xff]
    %v290 = vld [vmem:[#allocation7 + $0x370] sm:$0xff]
    %v291 = vld [vmem:[#allocation7 + $0x378] sm:$0xff]
    %v292 = vld [vmem:[#allocation7 + $0x380] sm:$0xff]
    %v293 = vld [vmem:[#allocation7 + $0x388] sm:$0xff]
    %v294 = vld [vmem:[#allocation7 + $0x390] sm:$0xff]
    %v295 = vld [vmem:[#allocation7 + $0x398] sm:$0xff]
    %v296 = vld [vmem:[#allocation7 + $0x3a0] sm:$0xff]
    %v297 = vld [vmem:[#allocation7 + $0x3a8] sm:$0xff]
    %v298 = vld [vmem:[#allocation7 + $0x3b0] sm:$0xff]
    %v299 = vld [vmem:[#allocation7 + $0x3b8] sm:$0xff]
    %v300 = vld [vmem:[#allocation7 + $0x3c0] sm:$0xff]
    %v301 = vld [vmem:[#allocation7 + $0x3c8] sm:$0xff]
    %v302 = vld [vmem:[#allocation7 + $0x3d0] sm:$0xff]
    %v303 = vld [vmem:[#allocation7 + $0x3d8] sm:$0xff]
    %v304 = vld [vmem:[#allocation7 + $0x3e0] sm:$0xff]
    %v305 = vld [vmem:[#allocation7 + $0x3e8] sm:$0xff]
    %v306 = vld [vmem:[#allocation7 + $0x3f0] sm:$0xff]
    %v307 = vld [vmem:[#allocation7 + $0x3f8] sm:$0xff]
    %v309 = vlaneseq
    %v310 = vshrl.u32 %v309, 7
    %v311 = vsub.s32 0, %v310
    %v312 = vrot.slane %v176, %v311
    %v313 = vlaneseq
    %v314 = vshrl.u32 %v313, 7
    %v315 = vsub.s32 1, %v314
    %v316 = vrot.slane %v176, %v315
    %v317 = vlaneseq
    %v318 = vshrl.u32 %v317, 7
    %v319 = vsub.s32 2, %v318
    %v320 = vrot.slane %v176, %v319
    %v321 = vlaneseq
    %v322 = vshrl.u32 %v321, 7
    %v323 = vsub.s32 3, %v322
    %v324 = vrot.slane %v176, %v323
    %v457 = vunpack.c.l.b16 %v180
    %v458 = vunpack.c.h.b16 %v180
    %v459 = vunpack.c.l.b16 %v181
    %v460 = vunpack.c.h.b16 %v181
    %v461 = vunpack.c.l.b16 %v182
    %v462 = vunpack.c.h.b16 %v182
    %v463 = vunpack.c.l.b16 %v183
    %v464 = vunpack.c.h.b16 %v183
    %v465 = vunpack.c.l.b16 %v184
    %v466 = vunpack.c.h.b16 %v184
    %v467 = vunpack.c.l.b16 %v185
    %v468 = vunpack.c.h.b16 %v185
    %v469 = vunpack.c.l.b16 %v186
    %v470 = vunpack.c.h.b16 %v186
    %v471 = vunpack.c.l.b16 %v187
    %v472 = vunpack.c.h.b16 %v187
    %v473 = vunpack.c.l.b16 %v188
    %v474 = vunpack.c.h.b16 %v188
    %v475 = vunpack.c.l.b16 %v189
    %v476 = vunpack.c.h.b16 %v189
    %v477 = vunpack.c.l.b16 %v190
    %v478 = vunpack.c.h.b16 %v190
    %v479 = vunpack.c.l.b16 %v191
    %v480 = vunpack.c.h.b16 %v191
    %v481 = vunpack.c.l.b16 %v192
    %v482 = vunpack.c.h.b16 %v192
    %v483 = vunpack.c.l.b16 %v193
    %v484 = vunpack.c.h.b16 %v193
    %v485 = vunpack.c.l.b16 %v194
    %v486 = vunpack.c.h.b16 %v194
    %v487 = vunpack.c.l.b16 %v195
    %v488 = vunpack.c.h.b16 %v195
    %v489 = vunpack.c.l.b16 %v196
    %v490 = vunpack.c.h.b16 %v196
    %v491 = vunpack.c.l.b16 %v197
    %v492 = vunpack.c.h.b16 %v197
    %v493 = vunpack.c.l.b16 %v198
    %v494 = vunpack.c.h.b16 %v198
    %v495 = vunpack.c.l.b16 %v199
    %v496 = vunpack.c.h.b16 %v199
    %v497 = vunpack.c.l.b16 %v200
    %v498 = vunpack.c.h.b16 %v200
    %v499 = vunpack.c.l.b16 %v201
    %v500 = vunpack.c.h.b16 %v201
    %v501 = vunpack.c.l.b16 %v202
    %v502 = vunpack.c.h.b16 %v202
    %v503 = vunpack.c.l.b16 %v203
    %v504 = vunpack.c.h.b16 %v203
    %v505 = vunpack.c.l.b16 %v204
    %v506 = vunpack.c.h.b16 %v204
    %v507 = vunpack.c.l.b16 %v205
    %v508 = vunpack.c.h.b16 %v205
    %v509 = vunpack.c.l.b16 %v206
    %v510 = vunpack.c.h.b16 %v206
    %v511 = vunpack.c.l.b16 %v207
    %v512 = vunpack.c.h.b16 %v207
    %v513 = vunpack.c.l.b16 %v208
    %v514 = vunpack.c.h.b16 %v208
    %v515 = vunpack.c.l.b16 %v209
    %v516 = vunpack.c.h.b16 %v209
    %v517 = vunpack.c.l.b16 %v210
    %v518 = vunpack.c.h.b16 %v210
    %v519 = vunpack.c.l.b16 %v211
    %v520 = vunpack.c.h.b16 %v211
    %v521 = vunpack.c.l.b16 %v212
    %v522 = vunpack.c.h.b16 %v212
    %v523 = vunpack.c.l.b16 %v213
    %v524 = vunpack.c.h.b16 %v213
    %v525 = vunpack.c.l.b16 %v214
    %v526 = vunpack.c.h.b16 %v214
    %v527 = vunpack.c.l.b16 %v215
    %v528 = vunpack.c.h.b16 %v215
    %v529 = vunpack.c.l.b16 %v216
    %v530 = vunpack.c.h.b16 %v216
    %v531 = vunpack.c.l.b16 %v217
    %v532 = vunpack.c.h.b16 %v217
    %v533 = vunpack.c.l.b16 %v218
    %v534 = vunpack.c.h.b16 %v218
    %v535 = vunpack.c.l.b16 %v219
    %v536 = vunpack.c.h.b16 %v219
    %v537 = vunpack.c.l.b16 %v220
    %v538 = vunpack.c.h.b16 %v220
    %v539 = vunpack.c.l.b16 %v221
    %v540 = vunpack.c.h.b16 %v221
    %v541 = vunpack.c.l.b16 %v222
    %v542 = vunpack.c.h.b16 %v222
    %v543 = vunpack.c.l.b16 %v223
    %v544 = vunpack.c.h.b16 %v223
    %v545 = vunpack.c.l.b16 %v224
    %v546 = vunpack.c.h.b16 %v224
    %v547 = vunpack.c.l.b16 %v225
    %v548 = vunpack.c.h.b16 %v225
    %v549 = vunpack.c.l.b16 %v226
    %v550 = vunpack.c.h.b16 %v226
    %v551 = vunpack.c.l.b16 %v227
    %v552 = vunpack.c.h.b16 %v227
    %v553 = vunpack.c.l.b16 %v228
    %v554 = vunpack.c.h.b16 %v228
    %v555 = vunpack.c.l.b16 %v229
    %v556 = vunpack.c.h.b16 %v229
    %v557 = vunpack.c.l.b16 %v230
    %v558 = vunpack.c.h.b16 %v230
    %v559 = vunpack.c.l.b16 %v231
    %v560 = vunpack.c.h.b16 %v231
    %v561 = vunpack.c.l.b16 %v232
    %v562 = vunpack.c.h.b16 %v232
    %v563 = vunpack.c.l.b16 %v233
    %v564 = vunpack.c.h.b16 %v233
    %v565 = vunpack.c.l.b16 %v234
    %v566 = vunpack.c.h.b16 %v234
    %v567 = vunpack.c.l.b16 %v235
    %v568 = vunpack.c.h.b16 %v235
    %v569 = vunpack.c.l.b16 %v236
    %v570 = vunpack.c.h.b16 %v236
    %v571 = vunpack.c.l.b16 %v237
    %v572 = vunpack.c.h.b16 %v237
    %v573 = vunpack.c.l.b16 %v238
    %v574 = vunpack.c.h.b16 %v238
    %v575 = vunpack.c.l.b16 %v239
    %v576 = vunpack.c.h.b16 %v239
    %v577 = vunpack.c.l.b16 %v240
    %v578 = vunpack.c.h.b16 %v240
    %v579 = vunpack.c.l.b16 %v241
    %v580 = vunpack.c.h.b16 %v241
    %v581 = vunpack.c.l.b16 %v242
    %v582 = vunpack.c.h.b16 %v242
    %v583 = vunpack.c.l.b16 %v243
    %v584 = vunpack.c.h.b16 %v243
    %v585 = vunpack.c.l.b16 %v244
    %v586 = vunpack.c.h.b16 %v244
    %v587 = vunpack.c.l.b16 %v245
    %v588 = vunpack.c.h.b16 %v245
    %v589 = vunpack.c.l.b16 %v246
    %v590 = vunpack.c.h.b16 %v246
    %v591 = vunpack.c.l.b16 %v247
    %v592 = vunpack.c.h.b16 %v247
    %v593 = vunpack.c.l.b16 %v248
    %v594 = vunpack.c.h.b16 %v248
    %v595 = vunpack.c.l.b16 %v249
    %v596 = vunpack.c.h.b16 %v249
    %v597 = vunpack.c.l.b16 %v250
    %v598 = vunpack.c.h.b16 %v250
    %v599 = vunpack.c.l.b16 %v251
    %v600 = vunpack.c.h.b16 %v251
    %v601 = vunpack.c.l.b16 %v252
    %v602 = vunpack.c.h.b16 %v252
    %v603 = vunpack.c.l.b16 %v253
    %v604 = vunpack.c.h.b16 %v253
    %v605 = vunpack.c.l.b16 %v254
    %v606 = vunpack.c.h.b16 %v254
    %v607 = vunpack.c.l.b16 %v255
    %v608 = vunpack.c.h.b16 %v255
    %v609 = vunpack.c.l.b16 %v256
    %v610 = vunpack.c.h.b16 %v256
    %v611 = vunpack.c.l.b16 %v257
    %v612 = vunpack.c.h.b16 %v257
    %v613 = vunpack.c.l.b16 %v258
    %v614 = vunpack.c.h.b16 %v258
    %v615 = vunpack.c.l.b16 %v259
    %v616 = vunpack.c.h.b16 %v259
    %v617 = vunpack.c.l.b16 %v260
    %v618 = vunpack.c.h.b16 %v260
    %v619 = vunpack.c.l.b16 %v261
    %v620 = vunpack.c.h.b16 %v261
    %v621 = vunpack.c.l.b16 %v262
    %v622 = vunpack.c.h.b16 %v262
    %v623 = vunpack.c.l.b16 %v263
    %v624 = vunpack.c.h.b16 %v263
    %v625 = vunpack.c.l.b16 %v264
    %v626 = vunpack.c.h.b16 %v264
    %v627 = vunpack.c.l.b16 %v265
    %v628 = vunpack.c.h.b16 %v265
    %v629 = vunpack.c.l.b16 %v266
    %v630 = vunpack.c.h.b16 %v266
    %v631 = vunpack.c.l.b16 %v267
    %v632 = vunpack.c.h.b16 %v267
    %v633 = vunpack.c.l.b16 %v268
    %v634 = vunpack.c.h.b16 %v268
    %v635 = vunpack.c.l.b16 %v269
    %v636 = vunpack.c.h.b16 %v269
    %v637 = vunpack.c.l.b16 %v270
    %v638 = vunpack.c.h.b16 %v270
    %v639 = vunpack.c.l.b16 %v271
    %v640 = vunpack.c.h.b16 %v271
    %v641 = vunpack.c.l.b16 %v272
    %v642 = vunpack.c.h.b16 %v272
    %v643 = vunpack.c.l.b16 %v273
    %v644 = vunpack.c.h.b16 %v273
    %v645 = vunpack.c.l.b16 %v274
    %v646 = vunpack.c.h.b16 %v274
    %v647 = vunpack.c.l.b16 %v275
    %v648 = vunpack.c.h.b16 %v275
    %v649 = vunpack.c.l.b16 %v276
    %v650 = vunpack.c.h.b16 %v276
    %v651 = vunpack.c.l.b16 %v277
    %v652 = vunpack.c.h.b16 %v277
    %v653 = vunpack.c.l.b16 %v278
    %v654 = vunpack.c.h.b16 %v278
    %v655 = vunpack.c.l.b16 %v279
    %v656 = vunpack.c.h.b16 %v279
    %v657 = vunpack.c.l.b16 %v280
    %v658 = vunpack.c.h.b16 %v280
    %v659 = vunpack.c.l.b16 %v281
    %v660 = vunpack.c.h.b16 %v281
    %v661 = vunpack.c.l.b16 %v282
    %v662 = vunpack.c.h.b16 %v282
    %v663 = vunpack.c.l.b16 %v283
    %v664 = vunpack.c.h.b16 %v283
    %v665 = vunpack.c.l.b16 %v284
    %v666 = vunpack.c.h.b16 %v284
    %v667 = vunpack.c.l.b16 %v285
    %v668 = vunpack.c.h.b16 %v285
    %v669 = vunpack.c.l.b16 %v286
    %v670 = vunpack.c.h.b16 %v286
    %v671 = vunpack.c.l.b16 %v287
    %v672 = vunpack.c.h.b16 %v287
    %v673 = vunpack.c.l.b16 %v288
    %v674 = vunpack.c.h.b16 %v288
    %v675 = vunpack.c.l.b16 %v289
    %v676 = vunpack.c.h.b16 %v289
    %v677 = vunpack.c.l.b16 %v290
    %v678 = vunpack.c.h.b16 %v290
    %v679 = vunpack.c.l.b16 %v291
    %v680 = vunpack.c.h.b16 %v291
    %v681 = vunpack.c.l.b16 %v292
    %v682 = vunpack.c.h.b16 %v292
    %v683 = vunpack.c.l.b16 %v293
    %v684 = vunpack.c.h.b16 %v293
    %v685 = vunpack.c.l.b16 %v294
    %v686 = vunpack.c.h.b16 %v294
    %v687 = vunpack.c.l.b16 %v295
    %v688 = vunpack.c.h.b16 %v295
    %v689 = vunpack.c.l.b16 %v296
    %v690 = vunpack.c.h.b16 %v296
    %v691 = vunpack.c.l.b16 %v297
    %v692 = vunpack.c.h.b16 %v297
    %v693 = vunpack.c.l.b16 %v298
    %v694 = vunpack.c.h.b16 %v298
    %v695 = vunpack.c.l.b16 %v299
    %v696 = vunpack.c.h.b16 %v299
    %v697 = vunpack.c.l.b16 %v300
    %v698 = vunpack.c.h.b16 %v300
    %v699 = vunpack.c.l.b16 %v301
    %v700 = vunpack.c.h.b16 %v301
    %v701 = vunpack.c.l.b16 %v302
    %v702 = vunpack.c.h.b16 %v302
    %v703 = vunpack.c.l.b16 %v303
    %v704 = vunpack.c.h.b16 %v303
    %v705 = vunpack.c.l.b16 %v304
    %v706 = vunpack.c.h.b16 %v304
    %v707 = vunpack.c.l.b16 %v305
    %v708 = vunpack.c.h.b16 %v305
    %v709 = vunpack.c.l.b16 %v306
    %v710 = vunpack.c.h.b16 %v306
    %v711 = vunpack.c.l.b16 %v307
    %v712 = vunpack.c.h.b16 %v307
    %v713 = vpack.c.b16 %v461, %v457
    %v714 = vpack.c.b16 %v462, %v458
    %v715 = vpack.c.b16 %v463, %v459
    %v716 = vpack.c.b16 %v464, %v460
    %v717 = vpack.c.b16 %v469, %v465
    %v718 = vpack.c.b16 %v470, %v466
    %v719 = vpack.c.b16 %v471, %v467
    %v720 = vpack.c.b16 %v472, %v468
    %v721 = vpack.c.b16 %v477, %v473
    %v722 = vpack.c.b16 %v478, %v474
    %v723 = vpack.c.b16 %v479, %v475
    %v724 = vpack.c.b16 %v480, %v476
    %v725 = vpack.c.b16 %v485, %v481
    %v726 = vpack.c.b16 %v486, %v482
    %v727 = vpack.c.b16 %v487, %v483
    %v728 = vpack.c.b16 %v488, %v484
    %v729 = vpack.c.b16 %v493, %v489
    %v730 = vpack.c.b16 %v494, %v490
    %v731 = vpack.c.b16 %v495, %v491
    %v732 = vpack.c.b16 %v496, %v492
    %v733 = vpack.c.b16 %v501, %v497
    %v734 = vpack.c.b16 %v502, %v498
    %v735 = vpack.c.b16 %v503, %v499
    %v736 = vpack.c.b16 %v504, %v500
    %v737 = vpack.c.b16 %v509, %v505
    %v738 = vpack.c.b16 %v510, %v506
    %v739 = vpack.c.b16 %v511, %v507
    %v740 = vpack.c.b16 %v512, %v508
    %v741 = vpack.c.b16 %v517, %v513
    %v742 = vpack.c.b16 %v518, %v514
    %v743 = vpack.c.b16 %v519, %v515
    %v744 = vpack.c.b16 %v520, %v516
    %v745 = vpack.c.b16 %v525, %v521
    %v746 = vpack.c.b16 %v526, %v522
    %v747 = vpack.c.b16 %v527, %v523
    %v748 = vpack.c.b16 %v528, %v524
    %v749 = vpack.c.b16 %v533, %v529
    %v750 = vpack.c.b16 %v534, %v530
    %v751 = vpack.c.b16 %v535, %v531
    %v752 = vpack.c.b16 %v536, %v532
    %v753 = vpack.c.b16 %v541, %v537
    %v754 = vpack.c.b16 %v542, %v538
    %v755 = vpack.c.b16 %v543, %v539
    %v756 = vpack.c.b16 %v544, %v540
    %v757 = vpack.c.b16 %v549, %v545
    %v758 = vpack.c.b16 %v550, %v546
    %v759 = vpack.c.b16 %v551, %v547
    %v760 = vpack.c.b16 %v552, %v548
    %v761 = vpack.c.b16 %v557, %v553
    %v762 = vpack.c.b16 %v558, %v554
    %v763 = vpack.c.b16 %v559, %v555
    %v764 = vpack.c.b16 %v560, %v556
    %v765 = vpack.c.b16 %v565, %v561
    %v766 = vpack.c.b16 %v566, %v562
    %v767 = vpack.c.b16 %v567, %v563
    %v768 = vpack.c.b16 %v568, %v564
    %v769 = vpack.c.b16 %v573, %v569
    %v770 = vpack.c.b16 %v574, %v570
    %v771 = vpack.c.b16 %v575, %v571
    %v772 = vpack.c.b16 %v576, %v572
    %v773 = vpack.c.b16 %v581, %v577
    %v774 = vpack.c.b16 %v582, %v578
    %v775 = vpack.c.b16 %v583, %v579
    %v776 = vpack.c.b16 %v584, %v580
    %v777 = vpack.c.b16 %v589, %v585
    %v778 = vpack.c.b16 %v590, %v586
    %v779 = vpack.c.b16 %v591, %v587
    %v780 = vpack.c.b16 %v592, %v588
    %v781 = vpack.c.b16 %v597, %v593
    %v782 = vpack.c.b16 %v598, %v594
    %v783 = vpack.c.b16 %v599, %v595
    %v784 = vpack.c.b16 %v600, %v596
    %v785 = vpack.c.b16 %v605, %v601
    %v786 = vpack.c.b16 %v606, %v602
    %v787 = vpack.c.b16 %v607, %v603
    %v788 = vpack.c.b16 %v608, %v604
    %v789 = vpack.c.b16 %v613, %v609
    %v790 = vpack.c.b16 %v614, %v610
    %v791 = vpack.c.b16 %v615, %v611
    %v792 = vpack.c.b16 %v616, %v612
    %v793 = vpack.c.b16 %v621, %v617
    %v794 = vpack.c.b16 %v622, %v618
    %v795 = vpack.c.b16 %v623, %v619
    %v796 = vpack.c.b16 %v624, %v620
    %v797 = vpack.c.b16 %v629, %v625
    %v798 = vpack.c.b16 %v630, %v626
    %v799 = vpack.c.b16 %v631, %v627
    %v800 = vpack.c.b16 %v632, %v628
    %v801 = vpack.c.b16 %v637, %v633
    %v802 = vpack.c.b16 %v638, %v634
    %v803 = vpack.c.b16 %v639, %v635
    %v804 = vpack.c.b16 %v640, %v636
    %v805 = vpack.c.b16 %v645, %v641
    %v806 = vpack.c.b16 %v646, %v642
    %v807 = vpack.c.b16 %v647, %v643
    %v808 = vpack.c.b16 %v648, %v644
    %v809 = vpack.c.b16 %v653, %v649
    %v810 = vpack.c.b16 %v654, %v650
    %v811 = vpack.c.b16 %v655, %v651
    %v812 = vpack.c.b16 %v656, %v652
    %v813 = vpack.c.b16 %v661, %v657
    %v814 = vpack.c.b16 %v662, %v658
    %v815 = vpack.c.b16 %v663, %v659
    %v816 = vpack.c.b16 %v664, %v660
    %v817 = vpack.c.b16 %v669, %v665
    %v818 = vpack.c.b16 %v670, %v666
    %v819 = vpack.c.b16 %v671, %v667
    %v820 = vpack.c.b16 %v672, %v668
    %v821 = vpack.c.b16 %v677, %v673
    %v822 = vpack.c.b16 %v678, %v674
    %v823 = vpack.c.b16 %v679, %v675
    %v824 = vpack.c.b16 %v680, %v676
    %v825 = vpack.c.b16 %v685, %v681
    %v826 = vpack.c.b16 %v686, %v682
    %v827 = vpack.c.b16 %v687, %v683
    %v828 = vpack.c.b16 %v688, %v684
    %v829 = vpack.c.b16 %v693, %v689
    %v830 = vpack.c.b16 %v694, %v690
    %v831 = vpack.c.b16 %v695, %v691
    %v832 = vpack.c.b16 %v696, %v692
    %v833 = vpack.c.b16 %v701, %v697
    %v834 = vpack.c.b16 %v702, %v698
    %v835 = vpack.c.b16 %v703, %v699
    %v836 = vpack.c.b16 %v704, %v700
    %v837 = vpack.c.b16 %v709, %v705
    %v838 = vpack.c.b16 %v710, %v706
    %v839 = vpack.c.b16 %v711, %v707
    %v840 = vpack.c.b16 %v712, %v708
    %969 = vmatprep.subr.bf16.mxu0 %v742
    %970 = vmatpush1.bf16.msra.mxu0 %v741
    %971 = vmatprep.subr.bf16.mxu0 %v738
    %972 = vmatpush1.bf16.msra.mxu0 %v737
    %973 = vmatprep.subr.bf16.mxu0 %v734
    %974 = vmatpush1.bf16.msra.mxu0 %v733
    %975 = vmatprep.subr.bf16.mxu0 %v730
    %976 = vmatpush1.bf16.msra.mxu0 %v729
    %977 = vmatprep.subr.bf16.mxu0 %v726
    %978 = vmatpush1.bf16.msra.mxu0 %v725
    %979 = vmatprep.subr.bf16.mxu0 %v722
    %980 = vmatpush1.bf16.msra.mxu0 %v721
    %981 = vmatprep.subr.bf16.mxu0 %v718
    %982 = vmatpush1.bf16.msra.mxu0 %v717
    %983 = vmatprep.subr.bf16.mxu0 %v714
    %984 = vmatpush1.bf16.msra.mxu0 %v713
    %985 = vmatprep.subr.bf16.mxu0 %v774
    %986 = vmatpush2.bf16.msra.mxu0 %v773
    %987 = vmatprep.subr.bf16.mxu0 %v770
    %988 = vmatpush2.bf16.msra.mxu0 %v769
    %989 = vmatprep.subr.bf16.mxu0 %v766
    %990 = vmatpush2.bf16.msra.mxu0 %v765
    %991 = vmatprep.subr.bf16.mxu0 %v762
    %992 = vmatpush2.bf16.msra.mxu0 %v761
    %993 = vmatprep.subr.bf16.mxu0 %v758
    %994 = vmatpush2.bf16.msra.mxu0 %v757
    %995 = vmatprep.subr.bf16.mxu0 %v754
    %996 = vmatpush2.bf16.msra.mxu0 %v753
    %997 = vmatprep.subr.bf16.mxu0 %v750
    %998 = vmatpush2.bf16.msra.mxu0 %v749
    %999 = vmatprep.subr.bf16.mxu0 %v746
    %1000 = vmatpush2.bf16.msra.mxu0 %v745
    %1001 = vmatprep.mubr.bf16.mxu0 %v146
    %1002 = vmatmul.mubr.bf16.gmra.mxu0 %v145
    %v1003 = vpop.f32.mrf.mxu0
    %v1004 = vadd.f32 %v312, %v1003
    %v1005 = vpop.f32.mrf.mxu0
    %v1006 = vadd.f32 %v316, %v1005
    %v1007 = vpop.f32.mrf.mxu0
    %v1008 = vpop.f32.mrf.mxu0
    %1009 = vdwg.mxu0
    %1010 = vmatprep.subr.bf16.mxu0 %v806
    %1011 = vmatpush1.bf16.msra.mxu0 %v805
    %1012 = vmatprep.subr.bf16.mxu0 %v802
    %1013 = vmatpush1.bf16.msra.mxu0 %v801
    %1014 = vmatprep.subr.bf16.mxu0 %v798
    %1015 = vmatpush1.bf16.msra.mxu0 %v797
    %1016 = vmatprep.subr.bf16.mxu0 %v794
    %1017 = vmatpush1.bf16.msra.mxu0 %v793
    %1018 = vmatprep.subr.bf16.mxu0 %v790
    %1019 = vmatpush1.bf16.msra.mxu0 %v789
    %1020 = vmatprep.subr.bf16.mxu0 %v786
    %1021 = vmatpush1.bf16.msra.mxu0 %v785
    %1022 = vmatprep.subr.bf16.mxu0 %v782
    %1023 = vmatpush1.bf16.msra.mxu0 %v781
    %1024 = vmatprep.subr.bf16.mxu0 %v778
    %1025 = vmatpush1.bf16.msra.mxu0 %v777
    %1026 = vmatprep.subr.bf16.mxu0 %v838
    %1027 = vmatpush2.bf16.msra.mxu0 %v837
    %1028 = vmatprep.subr.bf16.mxu0 %v834
    %1029 = vmatpush2.bf16.msra.mxu0 %v833
    %1030 = vmatprep.subr.bf16.mxu0 %v830
    %1031 = vmatpush2.bf16.msra.mxu0 %v829
    %1032 = vmatprep.subr.bf16.mxu0 %v826
    %1033 = vmatpush2.bf16.msra.mxu0 %v825
    %1034 = vmatprep.subr.bf16.mxu0 %v822
    %1035 = vmatpush2.bf16.msra.mxu0 %v821
    %1036 = vmatprep.subr.bf16.mxu0 %v818
    %1037 = vmatpush2.bf16.msra.mxu0 %v817
    %1038 = vmatprep.subr.bf16.mxu0 %v814
    %1039 = vmatpush2.bf16.msra.mxu0 %v813
    %1040 = vmatprep.subr.bf16.mxu0 %v810
    %1041 = vmatpush2.bf16.msra.mxu0 %v809
    %1042 = vmatprep.mubr.bf16.mxu0 %v148
    %1043 = vmatmul.mubr.bf16.gmra.mxu0 %v147
    %v1044 = vpop.f32.mrf.mxu0
    %v1045 = vadd.f32 %v1004, %v1044
    %v1046 = vpop.f32.mrf.mxu0
    %v1047 = vadd.f32 %v1006, %v1046
    %v1048 = vpop.f32.mrf.mxu0
    %v1049 = vpop.f32.mrf.mxu0
    %1050 = vdwg.mxu0
    %1051 = vmatprep.subr.bf16.mxu0 %v744
    %1052 = vmatpush1.bf16.msra.mxu0 %v743
    %1053 = vmatprep.subr.bf16.mxu0 %v740
    %1054 = vmatpush1.bf16.msra.mxu0 %v739
    %1055 = vmatprep.subr.bf16.mxu0 %v736
    %1056 = vmatpush1.bf16.msra.mxu0 %v735
    %1057 = vmatprep.subr.bf16.mxu0 %v732
    %1058 = vmatpush1.bf16.msra.mxu0 %v731
    %1059 = vmatprep.subr.bf16.mxu0 %v728
    %1060 = vmatpush1.bf16.msra.mxu0 %v727
    %1061 = vmatprep.subr.bf16.mxu0 %v724
    %1062 = vmatpush1.bf16.msra.mxu0 %v723
    %1063 = vmatprep.subr.bf16.mxu0 %v720
    %1064 = vmatpush1.bf16.msra.mxu0 %v719
    %1065 = vmatprep.subr.bf16.mxu0 %v716
    %1066 = vmatpush1.bf16.msra.mxu0 %v715
    %1067 = vmatprep.subr.bf16.mxu0 %v776
    %1068 = vmatpush2.bf16.msra.mxu0 %v775
    %1069 = vmatprep.subr.bf16.mxu0 %v772
    %1070 = vmatpush2.bf16.msra.mxu0 %v771
    %1071 = vmatprep.subr.bf16.mxu0 %v768
    %1072 = vmatpush2.bf16.msra.mxu0 %v767
    %1073 = vmatprep.subr.bf16.mxu0 %v764
    %1074 = vmatpush2.bf16.msra.mxu0 %v763
    %1075 = vmatprep.subr.bf16.mxu0 %v760
    %1076 = vmatpush2.bf16.msra.mxu0 %v759
    %1077 = vmatprep.subr.bf16.mxu0 %v756
    %1078 = vmatpush2.bf16.msra.mxu0 %v755
    %1079 = vmatprep.subr.bf16.mxu0 %v752
    %1080 = vmatpush2.bf16.msra.mxu0 %v751
    %1081 = vmatprep.subr.bf16.mxu0 %v748
    %1082 = vmatpush2.bf16.msra.mxu0 %v747
    %1083 = vmatprep.mubr.bf16.mxu0 %v146
    %1084 = vmatmul.mubr.bf16.gmra.mxu0 %v145
    %v1085 = vpop.f32.mrf.mxu0
    %v1086 = vadd.f32 %v320, %v1085
    %v1087 = vpop.f32.mrf.mxu0
    %v1088 = vadd.f32 %v324, %v1087
    %v1089 = vpop.f32.mrf.mxu0
    %v1090 = vpop.f32.mrf.mxu0
    %1091 = vdwg.mxu0
    %1092 = vmatprep.subr.bf16.mxu0 %v808
    %1093 = vmatpush1.bf16.msra.mxu0 %v807
    %1094 = vmatprep.subr.bf16.mxu0 %v804
    %1095 = vmatpush1.bf16.msra.mxu0 %v803
    %1096 = vmatprep.subr.bf16.mxu0 %v800
    %1097 = vmatpush1.bf16.msra.mxu0 %v799
    %1098 = vmatprep.subr.bf16.mxu0 %v796
    %1099 = vmatpush1.bf16.msra.mxu0 %v795
    %1100 = vmatprep.subr.bf16.mxu0 %v792
    %1101 = vmatpush1.bf16.msra.mxu0 %v791
    %1102 = vmatprep.subr.bf16.mxu0 %v788
    %1103 = vmatpush1.bf16.msra.mxu0 %v787
    %1104 = vmatprep.subr.bf16.mxu0 %v784
    %1105 = vmatpush1.bf16.msra.mxu0 %v783
    %1106 = vmatprep.subr.bf16.mxu0 %v780
    %1107 = vmatpush1.bf16.msra.mxu0 %v779
    %1108 = vmatprep.subr.bf16.mxu0 %v840
    %1109 = vmatpush2.bf16.msra.mxu0 %v839
    %1110 = vmatprep.subr.bf16.mxu0 %v836
    %1111 = vmatpush2.bf16.msra.mxu0 %v835
    %1112 = vmatprep.subr.bf16.mxu0 %v832
    %1113 = vmatpush2.bf16.msra.mxu0 %v831
    %1114 = vmatprep.subr.bf16.mxu0 %v828
    %1115 = vmatpush2.bf16.msra.mxu0 %v827
    %1116 = vmatprep.subr.bf16.mxu0 %v824
    %1117 = vmatpush2.bf16.msra.mxu0 %v823
    %1118 = vmatprep.subr.bf16.mxu0 %v820
    %1119 = vmatpush2.bf16.msra.mxu0 %v819
    %1120 = vmatprep.subr.bf16.mxu0 %v816
    %1121 = vmatpush2.bf16.msra.mxu0 %v815
    %1122 = vmatprep.subr.bf16.mxu0 %v812
    %1123 = vmatpush2.bf16.msra.mxu0 %v811
    %1124 = vmatprep.mubr.bf16.mxu0 %v148
    %1125 = vmatmul.mubr.bf16.gmra.mxu0 %v147
    %v1126 = vpop.f32.mrf.mxu0
    %v1127 = vadd.f32 %v1086, %v1126
    %v1128 = vpop.f32.mrf.mxu0
    %v1129 = vadd.f32 %v1088, %v1128
    %v1130 = vpop.f32.mrf.mxu0
    %v1131 = vpop.f32.mrf.mxu0
    %1132 = vdwg.mxu0
    %v1133 = vmax.f32 %v1045, 0.0
    %v1134 = vmax.f32 %v1047, 0.0
    %v1135 = vmax.f32 %v1127, 0.0
    %v1136 = vmax.f32 %v1129, 0.0
    %v1137 = vld [vmem:[#allocation8] sm:$0xf]
    %v1138 = vld [vmem:[#allocation8 + $0x4] sm:$0xf]
    %v1139 = vld [vmem:[#allocation8 + $0x8] sm:$0xf]
    %v1140 = vld [vmem:[#allocation8 + $0xc] sm:$0xf]
    %v1141 = vld [vmem:[#allocation8 + $0x10] sm:$0xf]
    %v1142 = vld [vmem:[#allocation8 + $0x14] sm:$0xf]
    %v1143 = vld [vmem:[#allocation8 + $0x18] sm:$0xf]
    %v1144 = vld [vmem:[#allocation8 + $0x1c] sm:$0xf]
    %v1145 = vld [vmem:[#allocation8 + $0x20] sm:$0xf]
    %v1146 = vld [vmem:[#allocation8 + $0x24] sm:$0xf]
    %v1147 = vld [vmem:[#allocation8 + $0x28] sm:$0xf]
    %v1148 = vld [vmem:[#allocation8 + $0x2c] sm:$0xf]
    %v1149 = vld [vmem:[#allocation8 + $0x30] sm:$0xf]
    %v1150 = vld [vmem:[#allocation8 + $0x34] sm:$0xf]
    %v1151 = vld [vmem:[#allocation8 + $0x38] sm:$0xf]
    %v1152 = vld [vmem:[#allocation8 + $0x3c] sm:$0xf]
    %v1153 = vld [vmem:[#allocation8 + $0x40] sm:$0xf]
    %v1154 = vld [vmem:[#allocation8 + $0x44] sm:$0xf]
    %v1155 = vld [vmem:[#allocation8 + $0x48] sm:$0xf]
    %v1156 = vld [vmem:[#allocation8 + $0x4c] sm:$0xf]
    %v1157 = vld [vmem:[#allocation8 + $0x50] sm:$0xf]
    %v1158 = vld [vmem:[#allocation8 + $0x54] sm:$0xf]
    %v1159 = vld [vmem:[#allocation8 + $0x58] sm:$0xf]
    %v1160 = vld [vmem:[#allocation8 + $0x5c] sm:$0xf]
    %v1161 = vld [vmem:[#allocation8 + $0x60] sm:$0xf]
    %v1162 = vld [vmem:[#allocation8 + $0x64] sm:$0xf]
    %v1163 = vld [vmem:[#allocation8 + $0x68] sm:$0xf]
    %v1164 = vld [vmem:[#allocation8 + $0x6c] sm:$0xf]
    %v1165 = vld [vmem:[#allocation8 + $0x70] sm:$0xf]
    %v1166 = vld [vmem:[#allocation8 + $0x74] sm:$0xf]
    %v1167 = vld [vmem:[#allocation8 + $0x78] sm:$0xf]
    %v1168 = vld [vmem:[#allocation8 + $0x7c] sm:$0xf]
    %v1169 = vld [vmem:[#allocation8 + $0x80] sm:$0xf]
    %v1170 = vld [vmem:[#allocation8 + $0x84] sm:$0xf]
    %v1171 = vld [vmem:[#allocation8 + $0x88] sm:$0xf]
    %v1172 = vld [vmem:[#allocation8 + $0x8c] sm:$0xf]
    %v1173 = vld [vmem:[#allocation8 + $0x90] sm:$0xf]
    %v1174 = vld [vmem:[#allocation8 + $0x94] sm:$0xf]
    %v1175 = vld [vmem:[#allocation8 + $0x98] sm:$0xf]
    %v1176 = vld [vmem:[#allocation8 + $0x9c] sm:$0xf]
    %v1177 = vld [vmem:[#allocation8 + $0xa0] sm:$0xf]
    %v1178 = vld [vmem:[#allocation8 + $0xa4] sm:$0xf]
    %v1179 = vld [vmem:[#allocation8 + $0xa8] sm:$0xf]
    %v1180 = vld [vmem:[#allocation8 + $0xac] sm:$0xf]
    %v1181 = vld [vmem:[#allocation8 + $0xb0] sm:$0xf]
    %v1182 = vld [vmem:[#allocation8 + $0xb4] sm:$0xf]
    %v1183 = vld [vmem:[#allocation8 + $0xb8] sm:$0xf]
    %v1184 = vld [vmem:[#allocation8 + $0xbc] sm:$0xf]
    %v1185 = vld [vmem:[#allocation8 + $0xc0] sm:$0xf]
    %v1186 = vld [vmem:[#allocation8 + $0xc4] sm:$0xf]
    %v1187 = vld [vmem:[#allocation8 + $0xc8] sm:$0xf]
    %v1188 = vld [vmem:[#allocation8 + $0xcc] sm:$0xf]
    %v1189 = vld [vmem:[#allocation8 + $0xd0] sm:$0xf]
    %v1190 = vld [vmem:[#allocation8 + $0xd4] sm:$0xf]
    %v1191 = vld [vmem:[#allocation8 + $0xd8] sm:$0xf]
    %v1192 = vld [vmem:[#allocation8 + $0xdc] sm:$0xf]
    %v1193 = vld [vmem:[#allocation8 + $0xe0] sm:$0xf]
    %v1194 = vld [vmem:[#allocation8 + $0xe4] sm:$0xf]
    %v1195 = vld [vmem:[#allocation8 + $0xe8] sm:$0xf]
    %v1196 = vld [vmem:[#allocation8 + $0xec] sm:$0xf]
    %v1197 = vld [vmem:[#allocation8 + $0xf0] sm:$0xf]
    %v1198 = vld [vmem:[#allocation8 + $0xf4] sm:$0xf]
    %v1199 = vld [vmem:[#allocation8 + $0xf8] sm:$0xf]
    %v1200 = vld [vmem:[#allocation8 + $0xfc] sm:$0xf]
    %v1202 = vlaneseq
    %v1203 = vshrl.u32 %v1202, 7
    %v1204 = vsub.s32 0, %v1203
    %v1205 = vrot.slane %v177, %v1204
    %v1271 = vunpack.c.l.b16 %v1137
    %v1272 = vunpack.c.l.b16 %v1138
    %v1273 = vunpack.c.l.b16 %v1139
    %v1274 = vunpack.c.l.b16 %v1140
    %v1275 = vunpack.c.l.b16 %v1141
    %v1276 = vunpack.c.l.b16 %v1142
    %v1277 = vunpack.c.l.b16 %v1143
    %v1278 = vunpack.c.l.b16 %v1144
    %v1279 = vunpack.c.l.b16 %v1145
    %v1280 = vunpack.c.l.b16 %v1146
    %v1281 = vunpack.c.l.b16 %v1147
    %v1282 = vunpack.c.l.b16 %v1148
    %v1283 = vunpack.c.l.b16 %v1149
    %v1284 = vunpack.c.l.b16 %v1150
    %v1285 = vunpack.c.l.b16 %v1151
    %v1286 = vunpack.c.l.b16 %v1152
    %v1287 = vunpack.c.l.b16 %v1153
    %v1288 = vunpack.c.l.b16 %v1154
    %v1289 = vunpack.c.l.b16 %v1155
    %v1290 = vunpack.c.l.b16 %v1156
    %v1291 = vunpack.c.l.b16 %v1157
    %v1292 = vunpack.c.l.b16 %v1158
    %v1293 = vunpack.c.l.b16 %v1159
    %v1294 = vunpack.c.l.b16 %v1160
    %v1295 = vunpack.c.l.b16 %v1161
    %v1296 = vunpack.c.l.b16 %v1162
    %v1297 = vunpack.c.l.b16 %v1163
    %v1298 = vunpack.c.l.b16 %v1164
    %v1299 = vunpack.c.l.b16 %v1165
    %v1300 = vunpack.c.l.b16 %v1166
    %v1301 = vunpack.c.l.b16 %v1167
    %v1302 = vunpack.c.l.b16 %v1168
    %v1303 = vunpack.c.l.b16 %v1169
    %v1304 = vunpack.c.l.b16 %v1170
    %v1305 = vunpack.c.l.b16 %v1171
    %v1306 = vunpack.c.l.b16 %v1172
    %v1307 = vunpack.c.l.b16 %v1173
    %v1308 = vunpack.c.l.b16 %v1174
    %v1309 = vunpack.c.l.b16 %v1175
    %v1310 = vunpack.c.l.b16 %v1176
    %v1311 = vunpack.c.l.b16 %v1177
    %v1312 = vunpack.c.l.b16 %v1178
    %v1313 = vunpack.c.l.b16 %v1179
    %v1314 = vunpack.c.l.b16 %v1180
    %v1315 = vunpack.c.l.b16 %v1181
    %v1316 = vunpack.c.l.b16 %v1182
    %v1317 = vunpack.c.l.b16 %v1183
    %v1318 = vunpack.c.l.b16 %v1184
    %v1319 = vunpack.c.l.b16 %v1185
    %v1320 = vunpack.c.l.b16 %v1186
    %v1321 = vunpack.c.l.b16 %v1187
    %v1322 = vunpack.c.l.b16 %v1188
    %v1323 = vunpack.c.l.b16 %v1189
    %v1324 = vunpack.c.l.b16 %v1190
    %v1325 = vunpack.c.l.b16 %v1191
    %v1326 = vunpack.c.l.b16 %v1192
    %v1327 = vunpack.c.l.b16 %v1193
    %v1328 = vunpack.c.l.b16 %v1194
    %v1329 = vunpack.c.l.b16 %v1195
    %v1330 = vunpack.c.l.b16 %v1196
    %v1331 = vunpack.c.l.b16 %v1197
    %v1332 = vunpack.c.l.b16 %v1198
    %v1333 = vunpack.c.l.b16 %v1199
    %v1334 = vunpack.c.l.b16 %v1200
    %v1335 = vpack.c.b16 %v1272, %v1271
    %v1336 = vpack.c.b16 %v1274, %v1273
    %v1337 = vpack.c.b16 %v1276, %v1275
    %v1338 = vpack.c.b16 %v1278, %v1277
    %v1339 = vpack.c.b16 %v1280, %v1279
    %v1340 = vpack.c.b16 %v1282, %v1281
    %v1341 = vpack.c.b16 %v1284, %v1283
    %v1342 = vpack.c.b16 %v1286, %v1285
    %v1343 = vpack.c.b16 %v1288, %v1287
    %v1344 = vpack.c.b16 %v1290, %v1289
    %v1345 = vpack.c.b16 %v1292, %v1291
    %v1346 = vpack.c.b16 %v1294, %v1293
    %v1347 = vpack.c.b16 %v1296, %v1295
    %v1348 = vpack.c.b16 %v1298, %v1297
    %v1349 = vpack.c.b16 %v1300, %v1299
    %v1350 = vpack.c.b16 %v1302, %v1301
    %v1351 = vpack.c.b16 %v1304, %v1303
    %v1352 = vpack.c.b16 %v1306, %v1305
    %v1353 = vpack.c.b16 %v1308, %v1307
    %v1354 = vpack.c.b16 %v1310, %v1309
    %v1355 = vpack.c.b16 %v1312, %v1311
    %v1356 = vpack.c.b16 %v1314, %v1313
    %v1357 = vpack.c.b16 %v1316, %v1315
    %v1358 = vpack.c.b16 %v1318, %v1317
    %v1359 = vpack.c.b16 %v1320, %v1319
    %v1360 = vpack.c.b16 %v1322, %v1321
    %v1361 = vpack.c.b16 %v1324, %v1323
    %v1362 = vpack.c.b16 %v1326, %v1325
    %v1363 = vpack.c.b16 %v1328, %v1327
    %v1364 = vpack.c.b16 %v1330, %v1329
    %v1365 = vpack.c.b16 %v1332, %v1331
    %v1366 = vpack.c.b16 %v1334, %v1333
    %1399 = vmatprep.subr.bf16.mxu0 0
    %1400 = vmatpush1.bf16.msra.mxu0 %v1342
    %1401 = vmatprep.subr.bf16.mxu0 0
    %1402 = vmatpush1.bf16.msra.mxu0 %v1341
    %1403 = vmatprep.subr.bf16.mxu0 0
    %1404 = vmatpush1.bf16.msra.mxu0 %v1340
    %1405 = vmatprep.subr.bf16.mxu0 0
    %1406 = vmatpush1.bf16.msra.mxu0 %v1339
    %1407 = vmatprep.subr.bf16.mxu0 0
    %1408 = vmatpush1.bf16.msra.mxu0 %v1338
    %1409 = vmatprep.subr.bf16.mxu0 0
    %1410 = vmatpush1.bf16.msra.mxu0 %v1337
    %1411 = vmatprep.subr.bf16.mxu0 0
    %1412 = vmatpush1.bf16.msra.mxu0 %v1336
    %1413 = vmatprep.subr.bf16.mxu0 0
    %1414 = vmatpush1.bf16.msra.mxu0 %v1335
    %1415 = vmatprep.subr.bf16.mxu0 0
    %1416 = vmatpush2.bf16.msra.mxu0 %v1350
    %1417 = vmatprep.subr.bf16.mxu0 0
    %1418 = vmatpush2.bf16.msra.mxu0 %v1349
    %1419 = vmatprep.subr.bf16.mxu0 0
    %1420 = vmatpush2.bf16.msra.mxu0 %v1348
    %1421 = vmatprep.subr.bf16.mxu0 0
    %1422 = vmatpush2.bf16.msra.mxu0 %v1347
    %1423 = vmatprep.subr.bf16.mxu0 0
    %1424 = vmatpush2.bf16.msra.mxu0 %v1346
    %1425 = vmatprep.subr.bf16.mxu0 0
    %1426 = vmatpush2.bf16.msra.mxu0 %v1345
    %1427 = vmatprep.subr.bf16.mxu0 0
    %1428 = vmatpush2.bf16.msra.mxu0 %v1344
    %1429 = vmatprep.subr.bf16.mxu0 0
    %1430 = vmatpush2.bf16.msra.mxu0 %v1343
    %1431 = vmatprep.mubr.bf16.mxu0 %v173
    %1432 = vmatmul.mubr.bf16.gmra.mxu0 %v172
    %v1433 = vpop.f32.mrf.mxu0
    %v1434 = vadd.f32 %v1205, %v1433
    %v1435 = vpop.f32.mrf.mxu0
    %v1436 = vpop.f32.mrf.mxu0
    %v1437 = vpop.f32.mrf.mxu0
    %1438 = vdwg.mxu0
    %1439 = vmatprep.subr.bf16.mxu0 0
    %1440 = vmatpush1.bf16.msra.mxu0 %v1358
    %1441 = vmatprep.subr.bf16.mxu0 0
    %1442 = vmatpush1.bf16.msra.mxu0 %v1357
    %1443 = vmatprep.subr.bf16.mxu0 0
    %1444 = vmatpush1.bf16.msra.mxu0 %v1356
    %1445 = vmatprep.subr.bf16.mxu0 0
    %1446 = vmatpush1.bf16.msra.mxu0 %v1355
    %1447 = vmatprep.subr.bf16.mxu0 0
    %1448 = vmatpush1.bf16.msra.mxu0 %v1354
    %1449 = vmatprep.subr.bf16.mxu0 0
    %1450 = vmatpush1.bf16.msra.mxu0 %v1353
    %1451 = vmatprep.subr.bf16.mxu0 0
    %1452 = vmatpush1.bf16.msra.mxu0 %v1352
    %1453 = vmatprep.subr.bf16.mxu0 0
    %1454 = vmatpush1.bf16.msra.mxu0 %v1351
    %1455 = vmatprep.subr.bf16.mxu0 0
    %1456 = vmatpush2.bf16.msra.mxu0 %v1366
    %1457 = vmatprep.subr.bf16.mxu0 0
    %1458 = vmatpush2.bf16.msra.mxu0 %v1365
    %1459 = vmatprep.subr.bf16.mxu0 0
    %1460 = vmatpush2.bf16.msra.mxu0 %v1364
    %1461 = vmatprep.subr.bf16.mxu0 0
    %1462 = vmatpush2.bf16.msra.mxu0 %v1363
    %1463 = vmatprep.subr.bf16.mxu0 0
    %1464 = vmatpush2.bf16.msra.mxu0 %v1362
    %1465 = vmatprep.subr.bf16.mxu0 0
    %1466 = vmatpush2.bf16.msra.mxu0 %v1361
    %1467 = vmatprep.subr.bf16.mxu0 0
    %1468 = vmatpush2.bf16.msra.mxu0 %v1360
    %1469 = vmatprep.subr.bf16.mxu0 0
    %1470 = vmatpush2.bf16.msra.mxu0 %v1359
    %1471 = vmatprep.mubr.bf16.mxu0 %v175
    %1472 = vmatmul.mubr.bf16.gmra.mxu0 %v174
    %v1473 = vpop.f32.mrf.mxu0
    %v1474 = vadd.f32 %v1434, %v1473
    %v1475 = vpop.f32.mrf.mxu0
    %v1476 = vpop.f32.mrf.mxu0
    %v1477 = vpop.f32.mrf.mxu0
    %1478 = vdwg.mxu0
    %v1479 = vmax.f32 %v1474, 0.0
    %v1480 = vpack.c.bf16 %v1133, %v1133
    %v1481 = vpack.c.bf16 %v1134, %v1134
    %v1482 = vpack.c.bf16 %v1135, %v1135
    %v1483 = vpack.c.bf16 %v1136, %v1136
    %v1484 = vld [vmem:[#allocation10] sm:$0xff]
    %v1485 = vld [vmem:[#allocation10 + $0x8] sm:$0xff]
    %v1486 = vld [vmem:[#allocation10 + $0x10] sm:$0xff]
    %v1487 = vld [vmem:[#allocation10 + $0x18] sm:$0xff]
    %v1488 = vld [vmem:[#allocation10 + $0x20] sm:$0xff]
    %v1489 = vld [vmem:[#allocation10 + $0x28] sm:$0xff]
    %v1490 = vld [vmem:[#allocation10 + $0x30] sm:$0xff]
    %v1491 = vld [vmem:[#allocation10 + $0x38] sm:$0xff]
    %v1492 = vld [vmem:[#allocation10 + $0x40] sm:$0xff]
    %v1493 = vld [vmem:[#allocation10 + $0x48] sm:$0xff]
    %v1494 = vld [vmem:[#allocation10 + $0x50] sm:$0xff]
    %v1495 = vld [vmem:[#allocation10 + $0x58] sm:$0xff]
    %v1496 = vld [vmem:[#allocation10 + $0x60] sm:$0xff]
    %v1497 = vld [vmem:[#allocation10 + $0x68] sm:$0xff]
    %v1498 = vld [vmem:[#allocation10 + $0x70] sm:$0xff]
    %v1499 = vld [vmem:[#allocation10 + $0x78] sm:$0xff]
    %v1500 = vld [vmem:[#allocation10 + $0x80] sm:$0xff]
    %v1501 = vld [vmem:[#allocation10 + $0x88] sm:$0xff]
    %v1502 = vld [vmem:[#allocation10 + $0x90] sm:$0xff]
    %v1503 = vld [vmem:[#allocation10 + $0x98] sm:$0xff]
    %v1504 = vld [vmem:[#allocation10 + $0xa0] sm:$0xff]
    %v1505 = vld [vmem:[#allocation10 + $0xa8] sm:$0xff]
    %v1506 = vld [vmem:[#allocation10 + $0xb0] sm:$0xff]
    %v1507 = vld [vmem:[#allocation10 + $0xb8] sm:$0xff]
    %v1508 = vld [vmem:[#allocation10 + $0xc0] sm:$0xff]
    %v1509 = vld [vmem:[#allocation10 + $0xc8] sm:$0xff]
    %v1510 = vld [vmem:[#allocation10 + $0xd0] sm:$0xff]
    %v1511 = vld [vmem:[#allocation10 + $0xd8] sm:$0xff]
    %v1512 = vld [vmem:[#allocation10 + $0xe0] sm:$0xff]
    %v1513 = vld [vmem:[#allocation10 + $0xe8] sm:$0xff]
    %v1514 = vld [vmem:[#allocation10 + $0xf0] sm:$0xff]
    %v1515 = vld [vmem:[#allocation10 + $0xf8] sm:$0xff]
    %v1516 = vld [vmem:[#allocation10 + $0x100] sm:$0xff]
    %v1517 = vld [vmem:[#allocation10 + $0x108] sm:$0xff]
    %v1518 = vld [vmem:[#allocation10 + $0x110] sm:$0xff]
    %v1519 = vld [vmem:[#allocation10 + $0x118] sm:$0xff]
    %v1520 = vld [vmem:[#allocation10 + $0x120] sm:$0xff]
    %v1521 = vld [vmem:[#allocation10 + $0x128] sm:$0xff]
    %v1522 = vld [vmem:[#allocation10 + $0x130] sm:$0xff]
    %v1523 = vld [vmem:[#allocation10 + $0x138] sm:$0xff]
    %v1524 = vld [vmem:[#allocation10 + $0x140] sm:$0xff]
    %v1525 = vld [vmem:[#allocation10 + $0x148] sm:$0xff]
    %v1526 = vld [vmem:[#allocation10 + $0x150] sm:$0xff]
    %v1527 = vld [vmem:[#allocation10 + $0x158] sm:$0xff]
    %v1528 = vld [vmem:[#allocation10 + $0x160] sm:$0xff]
    %v1529 = vld [vmem:[#allocation10 + $0x168] sm:$0xff]
    %v1530 = vld [vmem:[#allocation10 + $0x170] sm:$0xff]
    %v1531 = vld [vmem:[#allocation10 + $0x178] sm:$0xff]
    %v1532 = vld [vmem:[#allocation10 + $0x180] sm:$0xff]
    %v1533 = vld [vmem:[#allocation10 + $0x188] sm:$0xff]
    %v1534 = vld [vmem:[#allocation10 + $0x190] sm:$0xff]
    %v1535 = vld [vmem:[#allocation10 + $0x198] sm:$0xff]
    %v1536 = vld [vmem:[#allocation10 + $0x1a0] sm:$0xff]
    %v1537 = vld [vmem:[#allocation10 + $0x1a8] sm:$0xff]
    %v1538 = vld [vmem:[#allocation10 + $0x1b0] sm:$0xff]
    %v1539 = vld [vmem:[#allocation10 + $0x1b8] sm:$0xff]
    %v1540 = vld [vmem:[#allocation10 + $0x1c0] sm:$0xff]
    %v1541 = vld [vmem:[#allocation10 + $0x1c8] sm:$0xff]
    %v1542 = vld [vmem:[#allocation10 + $0x1d0] sm:$0xff]
    %v1543 = vld [vmem:[#allocation10 + $0x1d8] sm:$0xff]
    %v1544 = vld [vmem:[#allocation10 + $0x1e0] sm:$0xff]
    %v1545 = vld [vmem:[#allocation10 + $0x1e8] sm:$0xff]
    %v1546 = vld [vmem:[#allocation10 + $0x1f0] sm:$0xff]
    %v1547 = vld [vmem:[#allocation10 + $0x1f8] sm:$0xff]
    %v1548 = vpack.c.bf16 %v1479, %v1479
    %v1549 = vld [vmem:[#allocation11] sm:$0xff]
    %v1550 = vld [vmem:[#allocation11 + $0x8] sm:$0xff]
    %v1551 = vld [vmem:[#allocation11 + $0x10] sm:$0xff]
    %v1552 = vld [vmem:[#allocation11 + $0x18] sm:$0xff]
    %v1553 = vld [vmem:[#allocation11 + $0x20] sm:$0xff]
    %v1554 = vld [vmem:[#allocation11 + $0x28] sm:$0xff]
    %v1555 = vld [vmem:[#allocation11 + $0x30] sm:$0xff]
    %v1556 = vld [vmem:[#allocation11 + $0x38] sm:$0xff]
    %v1557 = vld [vmem:[#allocation11 + $0x40] sm:$0xff]
    %v1558 = vld [vmem:[#allocation11 + $0x48] sm:$0xff]
    %v1559 = vld [vmem:[#allocation11 + $0x50] sm:$0xff]
    %v1560 = vld [vmem:[#allocation11 + $0x58] sm:$0xff]
    %v1561 = vld [vmem:[#allocation11 + $0x60] sm:$0xff]
    %v1562 = vld [vmem:[#allocation11 + $0x68] sm:$0xff]
    %v1563 = vld [vmem:[#allocation11 + $0x70] sm:$0xff]
    %v1564 = vld [vmem:[#allocation11 + $0x78] sm:$0xff]
    %v1581 = vunpack.c.l.b16 %v1549
    %v1582 = vunpack.c.h.b16 %v1549
    %v1583 = vunpack.c.l.b16 %v1550
    %v1584 = vunpack.c.h.b16 %v1550
    %v1585 = vunpack.c.l.b16 %v1551
    %v1586 = vunpack.c.h.b16 %v1551
    %v1587 = vunpack.c.l.b16 %v1552
    %v1588 = vunpack.c.h.b16 %v1552
    %v1589 = vunpack.c.l.b16 %v1553
    %v1590 = vunpack.c.h.b16 %v1553
    %v1591 = vunpack.c.l.b16 %v1554
    %v1592 = vunpack.c.h.b16 %v1554
    %v1593 = vunpack.c.l.b16 %v1555
    %v1594 = vunpack.c.h.b16 %v1555
    %v1595 = vunpack.c.l.b16 %v1556
    %v1596 = vunpack.c.h.b16 %v1556
    %v1597 = vunpack.c.l.b16 %v1557
    %v1598 = vunpack.c.h.b16 %v1557
    %v1599 = vunpack.c.l.b16 %v1558
    %v1600 = vunpack.c.h.b16 %v1558
    %v1601 = vunpack.c.l.b16 %v1559
    %v1602 = vunpack.c.h.b16 %v1559
    %v1603 = vunpack.c.l.b16 %v1560
    %v1604 = vunpack.c.h.b16 %v1560
    %v1605 = vunpack.c.l.b16 %v1561
    %v1606 = vunpack.c.h.b16 %v1561
    %v1607 = vunpack.c.l.b16 %v1562
    %v1608 = vunpack.c.h.b16 %v1562
    %v1609 = vunpack.c.l.b16 %v1563
    %v1610 = vunpack.c.h.b16 %v1563
    %v1611 = vunpack.c.l.b16 %v1564
    %v1612 = vunpack.c.h.b16 %v1564
    %v1613 = vpack.c.b16 %v1583, %v1581
    %v1614 = vpack.c.b16 %v1584, %v1582
    %v1615 = vpack.c.b16 %v1587, %v1585
    %v1616 = vpack.c.b16 %v1588, %v1586
    %v1617 = vpack.c.b16 %v1591, %v1589
    %v1618 = vpack.c.b16 %v1592, %v1590
    %v1619 = vpack.c.b16 %v1595, %v1593
    %v1620 = vpack.c.b16 %v1596, %v1594
    %v1621 = vpack.c.b16 %v1599, %v1597
    %v1622 = vpack.c.b16 %v1600, %v1598
    %v1623 = vpack.c.b16 %v1603, %v1601
    %v1624 = vpack.c.b16 %v1604, %v1602
    %v1625 = vpack.c.b16 %v1607, %v1605
    %v1626 = vpack.c.b16 %v1608, %v1606
    %v1627 = vpack.c.b16 %v1611, %v1609
    %v1628 = vpack.c.b16 %v1612, %v1610
    %1645 = vmatprep.subr.bf16.mxu0 %v1628
    %1646 = vmatpush1.bf16.msra.mxu0 %v1627
    %1647 = vmatprep.subr.bf16.mxu0 %v1626
    %1648 = vmatpush1.bf16.msra.mxu0 %v1625
    %1649 = vmatprep.subr.bf16.mxu0 %v1624
    %1650 = vmatpush1.bf16.msra.mxu0 %v1623
    %1651 = vmatprep.subr.bf16.mxu0 %v1622
    %1652 = vmatpush1.bf16.msra.mxu0 %v1621
    %1653 = vmatprep.subr.bf16.mxu0 %v1620
    %1654 = vmatpush1.bf16.msra.mxu0 %v1619
    %1655 = vmatprep.subr.bf16.mxu0 %v1618
    %1656 = vmatpush1.bf16.msra.mxu0 %v1617
    %1657 = vmatprep.subr.bf16.mxu0 %v1616
    %1658 = vmatpush1.bf16.msra.mxu0 %v1615
    %1659 = vmatprep.subr.bf16.mxu0 %v1614
    %1660 = vmatpush1.bf16.msra.mxu0 %v1613
    %1661 = vmatprep.subr.bf16.mxu0 0
    %1662 = vmatpush2.bf16.msra.mxu0 0
    %1663 = vmatprep.subr.bf16.mxu0 0
    %1664 = vmatpush2.bf16.msra.mxu0 0
    %1665 = vmatprep.subr.bf16.mxu0 0
    %1666 = vmatpush2.bf16.msra.mxu0 0
    %1667 = vmatprep.subr.bf16.mxu0 0
    %1668 = vmatpush2.bf16.msra.mxu0 0
    %1669 = vmatprep.subr.bf16.mxu0 0
    %1670 = vmatpush2.bf16.msra.mxu0 0
    %1671 = vmatprep.subr.bf16.mxu0 0
    %1672 = vmatpush2.bf16.msra.mxu0 0
    %1673 = vmatprep.subr.bf16.mxu0 0
    %1674 = vmatpush2.bf16.msra.mxu0 0
    %1675 = vmatprep.subr.bf16.mxu0 0
    %1676 = vmatpush2.bf16.msra.mxu0 0
    %1677 = vmatprep.mubr.bf16.mxu0 0
    %1678 = vmatmul.mubr.bf16.gmra.mxu0 %v1548
    %v1679 = vpop.f32.mrf.mxu0
    %v1680 = vadd.f32 0.0, %v1679
    %v1681 = vpop.f32.mrf.mxu0
    %v1682 = vadd.f32 0.0, %v1681
    %v1683 = vpop.f32.mrf.mxu0
    %v1684 = vpop.f32.mrf.mxu0
    %1685 = vdwg.mxu0
    %v1750 = vunpack.c.l.b16 %v1484
    %v1751 = vunpack.c.h.b16 %v1484
    %v1752 = vunpack.c.l.b16 %v1485
    %v1753 = vunpack.c.h.b16 %v1485
    %v1754 = vunpack.c.l.b16 %v1486
    %v1755 = vunpack.c.h.b16 %v1486
    %v1756 = vunpack.c.l.b16 %v1487
    %v1757 = vunpack.c.h.b16 %v1487
    %v1758 = vunpack.c.l.b16 %v1488
    %v1759 = vunpack.c.h.b16 %v1488
    %v1760 = vunpack.c.l.b16 %v1489
    %v1761 = vunpack.c.h.b16 %v1489
    %v1762 = vunpack.c.l.b16 %v1490
    %v1763 = vunpack.c.h.b16 %v1490
    %v1764 = vunpack.c.l.b16 %v1491
    %v1765 = vunpack.c.h.b16 %v1491
    %v1766 = vunpack.c.l.b16 %v1492
    %v1767 = vunpack.c.h.b16 %v1492
    %v1768 = vunpack.c.l.b16 %v1493
    %v1769 = vunpack.c.h.b16 %v1493
    %v1770 = vunpack.c.l.b16 %v1494
    %v1771 = vunpack.c.h.b16 %v1494
    %v1772 = vunpack.c.l.b16 %v1495
    %v1773 = vunpack.c.h.b16 %v1495
    %v1774 = vunpack.c.l.b16 %v1496
    %v1775 = vunpack.c.h.b16 %v1496
    %v1776 = vunpack.c.l.b16 %v1497
    %v1777 = vunpack.c.h.b16 %v1497
    %v1778 = vunpack.c.l.b16 %v1498
    %v1779 = vunpack.c.h.b16 %v1498
    %v1780 = vunpack.c.l.b16 %v1499
    %v1781 = vunpack.c.h.b16 %v1499
    %v1782 = vunpack.c.l.b16 %v1500
    %v1783 = vunpack.c.h.b16 %v1500
    %v1784 = vunpack.c.l.b16 %v1501
    %v1785 = vunpack.c.h.b16 %v1501
    %v1786 = vunpack.c.l.b16 %v1502
    %v1787 = vunpack.c.h.b16 %v1502
    %v1788 = vunpack.c.l.b16 %v1503
    %v1789 = vunpack.c.h.b16 %v1503
    %v1790 = vunpack.c.l.b16 %v1504
    %v1791 = vunpack.c.h.b16 %v1504
    %v1792 = vunpack.c.l.b16 %v1505
    %v1793 = vunpack.c.h.b16 %v1505
    %v1794 = vunpack.c.l.b16 %v1506
    %v1795 = vunpack.c.h.b16 %v1506
    %v1796 = vunpack.c.l.b16 %v1507
    %v1797 = vunpack.c.h.b16 %v1507
    %v1798 = vunpack.c.l.b16 %v1508
    %v1799 = vunpack.c.h.b16 %v1508
    %v1800 = vunpack.c.l.b16 %v1509
    %v1801 = vunpack.c.h.b16 %v1509
    %v1802 = vunpack.c.l.b16 %v1510
    %v1803 = vunpack.c.h.b16 %v1510
    %v1804 = vunpack.c.l.b16 %v1511
    %v1805 = vunpack.c.h.b16 %v1511
    %v1806 = vunpack.c.l.b16 %v1512
    %v1807 = vunpack.c.h.b16 %v1512
    %v1808 = vunpack.c.l.b16 %v1513
    %v1809 = vunpack.c.h.b16 %v1513
    %v1810 = vunpack.c.l.b16 %v1514
    %v1811 = vunpack.c.h.b16 %v1514
    %v1812 = vunpack.c.l.b16 %v1515
    %v1813 = vunpack.c.h.b16 %v1515
    %v1814 = vunpack.c.l.b16 %v1516
    %v1815 = vunpack.c.h.b16 %v1516
    %v1816 = vunpack.c.l.b16 %v1517
    %v1817 = vunpack.c.h.b16 %v1517
    %v1818 = vunpack.c.l.b16 %v1518
    %v1819 = vunpack.c.h.b16 %v1518
    %v1820 = vunpack.c.l.b16 %v1519
    %v1821 = vunpack.c.h.b16 %v1519
    %v1822 = vunpack.c.l.b16 %v1520
    %v1823 = vunpack.c.h.b16 %v1520
    %v1824 = vunpack.c.l.b16 %v1521
    %v1825 = vunpack.c.h.b16 %v1521
    %v1826 = vunpack.c.l.b16 %v1522
    %v1827 = vunpack.c.h.b16 %v1522
    %v1828 = vunpack.c.l.b16 %v1523
    %v1829 = vunpack.c.h.b16 %v1523
    %v1830 = vunpack.c.l.b16 %v1524
    %v1831 = vunpack.c.h.b16 %v1524
    %v1832 = vunpack.c.l.b16 %v1525
    %v1833 = vunpack.c.h.b16 %v1525
    %v1834 = vunpack.c.l.b16 %v1526
    %v1835 = vunpack.c.h.b16 %v1526
    %v1836 = vunpack.c.l.b16 %v1527
    %v1837 = vunpack.c.h.b16 %v1527
    %v1838 = vunpack.c.l.b16 %v1528
    %v1839 = vunpack.c.h.b16 %v1528
    %v1840 = vunpack.c.l.b16 %v1529
    %v1841 = vunpack.c.h.b16 %v1529
    %v1842 = vunpack.c.l.b16 %v1530
    %v1843 = vunpack.c.h.b16 %v1530
    %v1844 = vunpack.c.l.b16 %v1531
    %v1845 = vunpack.c.h.b16 %v1531
    %v1846 = vunpack.c.l.b16 %v1532
    %v1847 = vunpack.c.h.b16 %v1532
    %v1848 = vunpack.c.l.b16 %v1533
    %v1849 = vunpack.c.h.b16 %v1533
    %v1850 = vunpack.c.l.b16 %v1534
    %v1851 = vunpack.c.h.b16 %v1534
    %v1852 = vunpack.c.l.b16 %v1535
    %v1853 = vunpack.c.h.b16 %v1535
    %v1854 = vunpack.c.l.b16 %v1536
    %v1855 = vunpack.c.h.b16 %v1536
    %v1856 = vunpack.c.l.b16 %v1537
    %v1857 = vunpack.c.h.b16 %v1537
    %v1858 = vunpack.c.l.b16 %v1538
    %v1859 = vunpack.c.h.b16 %v1538
    %v1860 = vunpack.c.l.b16 %v1539
    %v1861 = vunpack.c.h.b16 %v1539
    %v1862 = vunpack.c.l.b16 %v1540
    %v1863 = vunpack.c.h.b16 %v1540
    %v1864 = vunpack.c.l.b16 %v1541
    %v1865 = vunpack.c.h.b16 %v1541
    %v1866 = vunpack.c.l.b16 %v1542
    %v1867 = vunpack.c.h.b16 %v1542
    %v1868 = vunpack.c.l.b16 %v1543
    %v1869 = vunpack.c.h.b16 %v1543
    %v1870 = vunpack.c.l.b16 %v1544
    %v1871 = vunpack.c.h.b16 %v1544
    %v1872 = vunpack.c.l.b16 %v1545
    %v1873 = vunpack.c.h.b16 %v1545
    %v1874 = vunpack.c.l.b16 %v1546
    %v1875 = vunpack.c.h.b16 %v1546
    %v1876 = vunpack.c.l.b16 %v1547
    %v1877 = vunpack.c.h.b16 %v1547
    %v1878 = vpack.c.b16 %v1752, %v1750
    %v1879 = vpack.c.b16 %v1753, %v1751
    %v1880 = vpack.c.b16 %v1756, %v1754
    %v1881 = vpack.c.b16 %v1757, %v1755
    %v1882 = vpack.c.b16 %v1760, %v1758
    %v1883 = vpack.c.b16 %v1761, %v1759
    %v1884 = vpack.c.b16 %v1764, %v1762
    %v1885 = vpack.c.b16 %v1765, %v1763
    %v1886 = vpack.c.b16 %v1768, %v1766
    %v1887 = vpack.c.b16 %v1769, %v1767
    %v1888 = vpack.c.b16 %v1772, %v1770
    %v1889 = vpack.c.b16 %v1773, %v1771
    %v1890 = vpack.c.b16 %v1776, %v1774
    %v1891 = vpack.c.b16 %v1777, %v1775
    %v1892 = vpack.c.b16 %v1780, %v1778
    %v1893 = vpack.c.b16 %v1781, %v1779
    %v1894 = vpack.c.b16 %v1784, %v1782
    %v1895 = vpack.c.b16 %v1785, %v1783
    %v1896 = vpack.c.b16 %v1788, %v1786
    %v1897 = vpack.c.b16 %v1789, %v1787
    %v1898 = vpack.c.b16 %v1792, %v1790
    %v1899 = vpack.c.b16 %v1793, %v1791
    %v1900 = vpack.c.b16 %v1796, %v1794
    %v1901 = vpack.c.b16 %v1797, %v1795
    %v1902 = vpack.c.b16 %v1800, %v1798
    %v1903 = vpack.c.b16 %v1801, %v1799
    %v1904 = vpack.c.b16 %v1804, %v1802
    %v1905 = vpack.c.b16 %v1805, %v1803
    %v1906 = vpack.c.b16 %v1808, %v1806
    %v1907 = vpack.c.b16 %v1809, %v1807
    %v1908 = vpack.c.b16 %v1812, %v1810
    %v1909 = vpack.c.b16 %v1813, %v1811
    %v1910 = vpack.c.b16 %v1816, %v1814
    %v1911 = vpack.c.b16 %v1817, %v1815
    %v1912 = vpack.c.b16 %v1820, %v1818
    %v1913 = vpack.c.b16 %v1821, %v1819
    %v1914 = vpack.c.b16 %v1824, %v1822
    %v1915 = vpack.c.b16 %v1825, %v1823
    %v1916 = vpack.c.b16 %v1828, %v1826
    %v1917 = vpack.c.b16 %v1829, %v1827
    %v1918 = vpack.c.b16 %v1832, %v1830
    %v1919 = vpack.c.b16 %v1833, %v1831
    %v1920 = vpack.c.b16 %v1836, %v1834
    %v1921 = vpack.c.b16 %v1837, %v1835
    %v1922 = vpack.c.b16 %v1840, %v1838
    %v1923 = vpack.c.b16 %v1841, %v1839
    %v1924 = vpack.c.b16 %v1844, %v1842
    %v1925 = vpack.c.b16 %v1845, %v1843
    %v1926 = vpack.c.b16 %v1848, %v1846
    %v1927 = vpack.c.b16 %v1849, %v1847
    %v1928 = vpack.c.b16 %v1852, %v1850
    %v1929 = vpack.c.b16 %v1853, %v1851
    %v1930 = vpack.c.b16 %v1856, %v1854
    %v1931 = vpack.c.b16 %v1857, %v1855
    %v1932 = vpack.c.b16 %v1860, %v1858
    %v1933 = vpack.c.b16 %v1861, %v1859
    %v1934 = vpack.c.b16 %v1864, %v1862
    %v1935 = vpack.c.b16 %v1865, %v1863
    %v1936 = vpack.c.b16 %v1868, %v1866
    %v1937 = vpack.c.b16 %v1869, %v1867
    %v1938 = vpack.c.b16 %v1872, %v1870
    %v1939 = vpack.c.b16 %v1873, %v1871
    %v1940 = vpack.c.b16 %v1876, %v1874
    %v1941 = vpack.c.b16 %v1877, %v1875
    %2006 = vmatprep.subr.bf16.mxu0 %v1893
    %2007 = vmatpush1.bf16.msra.mxu0 %v1892
    %2008 = vmatprep.subr.bf16.mxu0 %v1891
    %2009 = vmatpush1.bf16.msra.mxu0 %v1890
    %2010 = vmatprep.subr.bf16.mxu0 %v1889
    %2011 = vmatpush1.bf16.msra.mxu0 %v1888
    %2012 = vmatprep.subr.bf16.mxu0 %v1887
    %2013 = vmatpush1.bf16.msra.mxu0 %v1886
    %2014 = vmatprep.subr.bf16.mxu0 %v1885
    %2015 = vmatpush1.bf16.msra.mxu0 %v1884
    %2016 = vmatprep.subr.bf16.mxu0 %v1883
    %2017 = vmatpush1.bf16.msra.mxu0 %v1882
    %2018 = vmatprep.subr.bf16.mxu0 %v1881
    %2019 = vmatpush1.bf16.msra.mxu0 %v1880
    %2020 = vmatprep.subr.bf16.mxu0 %v1879
    %2021 = vmatpush1.bf16.msra.mxu0 %v1878
    %2022 = vmatprep.subr.bf16.mxu0 %v1909
    %2023 = vmatpush2.bf16.msra.mxu0 %v1908
    %2024 = vmatprep.subr.bf16.mxu0 %v1907
    %2025 = vmatpush2.bf16.msra.mxu0 %v1906
    %2026 = vmatprep.subr.bf16.mxu0 %v1905
    %2027 = vmatpush2.bf16.msra.mxu0 %v1904
    %2028 = vmatprep.subr.bf16.mxu0 %v1903
    %2029 = vmatpush2.bf16.msra.mxu0 %v1902
    %2030 = vmatprep.subr.bf16.mxu0 %v1901
    %2031 = vmatpush2.bf16.msra.mxu0 %v1900
    %2032 = vmatprep.subr.bf16.mxu0 %v1899
    %2033 = vmatpush2.bf16.msra.mxu0 %v1898
    %2034 = vmatprep.subr.bf16.mxu0 %v1897
    %2035 = vmatpush2.bf16.msra.mxu0 %v1896
    %2036 = vmatprep.subr.bf16.mxu0 %v1895
    %2037 = vmatpush2.bf16.msra.mxu0 %v1894
    %2038 = vmatprep.mubr.bf16.mxu0 %v1481
    %2039 = vmatmul.mubr.bf16.gmra.mxu0 %v1480
    %v2040 = vpop.f32.mrf.mxu0
    %v2041 = vadd.f32 %v1680, %v2040
    %v2042 = vpop.f32.mrf.mxu0
    %v2043 = vadd.f32 %v1682, %v2042
    %v2044 = vpop.f32.mrf.mxu0
    %v2045 = vpop.f32.mrf.mxu0
    %2046 = vdwg.mxu0
    %2047 = vmatprep.subr.bf16.mxu0 %v1925
    %2048 = vmatpush1.bf16.msra.mxu0 %v1924
    %2049 = vmatprep.subr.bf16.mxu0 %v1923
    %2050 = vmatpush1.bf16.msra.mxu0 %v1922
    %2051 = vmatprep.subr.bf16.mxu0 %v1921
    %2052 = vmatpush1.bf16.msra.mxu0 %v1920
    %2053 = vmatprep.subr.bf16.mxu0 %v1919
    %2054 = vmatpush1.bf16.msra.mxu0 %v1918
    %2055 = vmatprep.subr.bf16.mxu0 %v1917
    %2056 = vmatpush1.bf16.msra.mxu0 %v1916
    %2057 = vmatprep.subr.bf16.mxu0 %v1915
    %2058 = vmatpush1.bf16.msra.mxu0 %v1914
    %2059 = vmatprep.subr.bf16.mxu0 %v1913
    %2060 = vmatpush1.bf16.msra.mxu0 %v1912
    %2061 = vmatprep.subr.bf16.mxu0 %v1911
    %2062 = vmatpush1.bf16.msra.mxu0 %v1910
    %2063 = vmatprep.subr.bf16.mxu0 %v1941
    %2064 = vmatpush2.bf16.msra.mxu0 %v1940
    %2065 = vmatprep.subr.bf16.mxu0 %v1939
    %2066 = vmatpush2.bf16.msra.mxu0 %v1938
    %2067 = vmatprep.subr.bf16.mxu0 %v1937
    %2068 = vmatpush2.bf16.msra.mxu0 %v1936
    %2069 = vmatprep.subr.bf16.mxu0 %v1935
    %2070 = vmatpush2.bf16.msra.mxu0 %v1934
    %2071 = vmatprep.subr.bf16.mxu0 %v1933
    %2072 = vmatpush2.bf16.msra.mxu0 %v1932
    %2073 = vmatprep.subr.bf16.mxu0 %v1931
    %2074 = vmatpush2.bf16.msra.mxu0 %v1930
    %2075 = vmatprep.subr.bf16.mxu0 %v1929
    %2076 = vmatpush2.bf16.msra.mxu0 %v1928
    %2077 = vmatprep.subr.bf16.mxu0 %v1927
    %2078 = vmatpush2.bf16.msra.mxu0 %v1926
    %2079 = vmatprep.mubr.bf16.mxu0 %v1483
    %2080 = vmatmul.mubr.bf16.gmra.mxu0 %v1482
    %v2081 = vpop.f32.mrf.mxu0
    %v2082 = vadd.f32 %v2041, %v2081
    %v2083 = vpop.f32.mrf.mxu0
    %v2084 = vadd.f32 %v2043, %v2083
    %v2085 = vpop.f32.mrf.mxu0
    %v2086 = vpop.f32.mrf.mxu0
    %2087 = vdwg.mxu0
    %v2089 = vlaneseq
    %v2090 = vshrl.u32 %v2089, 7
    %v2091 = vsub.s32 0, %v2090
    %v2092 = vrot.slane %v178, %v2091
    %v2093 = vlaneseq
    %v2094 = vshrl.u32 %v2093, 7
    %v2095 = vsub.s32 1, %v2094
    %v2096 = vrot.slane %v178, %v2095
    %v2099 = vadd.f32 %v2082, %v2092
    %v2100 = vadd.f32 %v2084, %v2096
    %v2101 = vmax.f32 %v2099, 0.0
    %v2102 = vmax.f32 %v2100, 0.0
    %v2103 = vpack.c.bf16 %v2101, %v2101
    %v2104 = vpack.c.bf16 %v2102, %v2102
    %v2105 = vld [vmem:[#allocation13] sm:$0xf]
    %v2106 = vld [vmem:[#allocation13 + $0x4] sm:$0xf]
    %v2107 = vld [vmem:[#allocation13 + $0x8] sm:$0xf]
    %v2108 = vld [vmem:[#allocation13 + $0xc] sm:$0xf]
    %v2109 = vld [vmem:[#allocation13 + $0x10] sm:$0xf]
    %v2110 = vld [vmem:[#allocation13 + $0x14] sm:$0xf]
    %v2111 = vld [vmem:[#allocation13 + $0x18] sm:$0xf]
    %v2112 = vld [vmem:[#allocation13 + $0x1c] sm:$0xf]
    %v2113 = vld [vmem:[#allocation13 + $0x20] sm:$0xf]
    %v2114 = vld [vmem:[#allocation13 + $0x24] sm:$0xf]
    %v2115 = vld [vmem:[#allocation13 + $0x28] sm:$0xf]
    %v2116 = vld [vmem:[#allocation13 + $0x2c] sm:$0xf]
    %v2117 = vld [vmem:[#allocation13 + $0x30] sm:$0xf]
    %v2118 = vld [vmem:[#allocation13 + $0x34] sm:$0xf]
    %v2119 = vld [vmem:[#allocation13 + $0x38] sm:$0xf]
    %v2120 = vld [vmem:[#allocation13 + $0x3c] sm:$0xf]
    %v2121 = vld [vmem:[#allocation13 + $0x40] sm:$0xf]
    %v2122 = vld [vmem:[#allocation13 + $0x44] sm:$0xf]
    %v2123 = vld [vmem:[#allocation13 + $0x48] sm:$0xf]
    %v2124 = vld [vmem:[#allocation13 + $0x4c] sm:$0xf]
    %v2125 = vld [vmem:[#allocation13 + $0x50] sm:$0xf]
    %v2126 = vld [vmem:[#allocation13 + $0x54] sm:$0xf]
    %v2127 = vld [vmem:[#allocation13 + $0x58] sm:$0xf]
    %v2128 = vld [vmem:[#allocation13 + $0x5c] sm:$0xf]
    %v2129 = vld [vmem:[#allocation13 + $0x60] sm:$0xf]
    %v2130 = vld [vmem:[#allocation13 + $0x64] sm:$0xf]
    %v2131 = vld [vmem:[#allocation13 + $0x68] sm:$0xf]
    %v2132 = vld [vmem:[#allocation13 + $0x6c] sm:$0xf]
    %v2133 = vld [vmem:[#allocation13 + $0x70] sm:$0xf]
    %v2134 = vld [vmem:[#allocation13 + $0x74] sm:$0xf]
    %v2135 = vld [vmem:[#allocation13 + $0x78] sm:$0xf]
    %v2136 = vld [vmem:[#allocation13 + $0x7c] sm:$0xf]
    %v2138 = vlaneseq
    %v2139 = vshrl.u32 %v2138, 7
    %v2140 = vsub.s32 0, %v2139
    %v2141 = vrot.slane %v179, %v2140
    %v2175 = vunpack.c.l.b16 %v2105
    %v2176 = vunpack.c.l.b16 %v2106
    %v2177 = vunpack.c.l.b16 %v2107
    %v2178 = vunpack.c.l.b16 %v2108
    %v2179 = vunpack.c.l.b16 %v2109
    %v2180 = vunpack.c.l.b16 %v2110
    %v2181 = vunpack.c.l.b16 %v2111
    %v2182 = vunpack.c.l.b16 %v2112
    %v2183 = vunpack.c.l.b16 %v2113
    %v2184 = vunpack.c.l.b16 %v2114
    %v2185 = vunpack.c.l.b16 %v2115
    %v2186 = vunpack.c.l.b16 %v2116
    %v2187 = vunpack.c.l.b16 %v2117
    %v2188 = vunpack.c.l.b16 %v2118
    %v2189 = vunpack.c.l.b16 %v2119
    %v2190 = vunpack.c.l.b16 %v2120
    %v2191 = vunpack.c.l.b16 %v2121
    %v2192 = vunpack.c.l.b16 %v2122
    %v2193 = vunpack.c.l.b16 %v2123
    %v2194 = vunpack.c.l.b16 %v2124
    %v2195 = vunpack.c.l.b16 %v2125
    %v2196 = vunpack.c.l.b16 %v2126
    %v2197 = vunpack.c.l.b16 %v2127
    %v2198 = vunpack.c.l.b16 %v2128
    %v2199 = vunpack.c.l.b16 %v2129
    %v2200 = vunpack.c.l.b16 %v2130
    %v2201 = vunpack.c.l.b16 %v2131
    %v2202 = vunpack.c.l.b16 %v2132
    %v2203 = vunpack.c.l.b16 %v2133
    %v2204 = vunpack.c.l.b16 %v2134
    %v2205 = vunpack.c.l.b16 %v2135
    %v2206 = vunpack.c.l.b16 %v2136
    %v2207 = vpack.c.b16 %v2176, %v2175
    %v2208 = vpack.c.b16 %v2178, %v2177
    %v2209 = vpack.c.b16 %v2180, %v2179
    %v2210 = vpack.c.b16 %v2182, %v2181
    %v2211 = vpack.c.b16 %v2184, %v2183
    %v2212 = vpack.c.b16 %v2186, %v2185
    %v2213 = vpack.c.b16 %v2188, %v2187
    %v2214 = vpack.c.b16 %v2190, %v2189
    %v2215 = vpack.c.b16 %v2192, %v2191
    %v2216 = vpack.c.b16 %v2194, %v2193
    %v2217 = vpack.c.b16 %v2196, %v2195
    %v2218 = vpack.c.b16 %v2198, %v2197
    %v2219 = vpack.c.b16 %v2200, %v2199
    %v2220 = vpack.c.b16 %v2202, %v2201
    %v2221 = vpack.c.b16 %v2204, %v2203
    %v2222 = vpack.c.b16 %v2206, %v2205
    %2239 = vmatprep.subr.bf16.mxu0 0
    %2240 = vmatpush1.bf16.msra.mxu0 %v2214
    %2241 = vmatprep.subr.bf16.mxu0 0
    %2242 = vmatpush1.bf16.msra.mxu0 %v2213
    %2243 = vmatprep.subr.bf16.mxu0 0
    %2244 = vmatpush1.bf16.msra.mxu0 %v2212
    %2245 = vmatprep.subr.bf16.mxu0 0
    %2246 = vmatpush1.bf16.msra.mxu0 %v2211
    %2247 = vmatprep.subr.bf16.mxu0 0
    %2248 = vmatpush1.bf16.msra.mxu0 %v2210
    %2249 = vmatprep.subr.bf16.mxu0 0
    %2250 = vmatpush1.bf16.msra.mxu0 %v2209
    %2251 = vmatprep.subr.bf16.mxu0 0
    %2252 = vmatpush1.bf16.msra.mxu0 %v2208
    %2253 = vmatprep.subr.bf16.mxu0 0
    %2254 = vmatpush1.bf16.msra.mxu0 %v2207
    %2255 = vmatprep.subr.bf16.mxu0 0
    %2256 = vmatpush2.bf16.msra.mxu0 %v2222
    %2257 = vmatprep.subr.bf16.mxu0 0
    %2258 = vmatpush2.bf16.msra.mxu0 %v2221
    %2259 = vmatprep.subr.bf16.mxu0 0
    %2260 = vmatpush2.bf16.msra.mxu0 %v2220
    %2261 = vmatprep.subr.bf16.mxu0 0
    %2262 = vmatpush2.bf16.msra.mxu0 %v2219
    %2263 = vmatprep.subr.bf16.mxu0 0
    %2264 = vmatpush2.bf16.msra.mxu0 %v2218
    %2265 = vmatprep.subr.bf16.mxu0 0
    %2266 = vmatpush2.bf16.msra.mxu0 %v2217
    %2267 = vmatprep.subr.bf16.mxu0 0
    %2268 = vmatpush2.bf16.msra.mxu0 %v2216
    %2269 = vmatprep.subr.bf16.mxu0 0
    %2270 = vmatpush2.bf16.msra.mxu0 %v2215
    %2271 = vmatprep.mubr.bf16.mxu0 %v2104
    %2272 = vmatmul.mubr.bf16.gmra.mxu0 %v2103
    %v2273 = vpop.f32.mrf.mxu0
    %v2274 = vadd.f32 %v2141, %v2273
    %v2275 = vpop.f32.mrf.mxu0
    %v2276 = vpop.f32.mrf.mxu0
    %v2277 = vpop.f32.mrf.mxu0
    %2278 = vdwg.mxu0
    %vm2279 = vcmask 1041408
    %v2280 = vsel %vm2279, %v2274, -inf
    %2281 = vmax.xlane.f32.xlu0 %v2280
    %v2282 = vpop.xlane.xlu0 %2281
    %v2283 = vsub.f32 %v2274, %v2282
    %v2284 = vmul.f32 %v2283, 1.442695
    %v2285 = vpow.pop %v2284
    %v2286 = vsel %vm2279, %v2285, 0.0
    %2287 = vadd.xlane.f32.xlu0 %v2286
    %v2288 = vpop.xlane.xlu0 %2287
    %v2289 = vrcp.pop %v2288
    %v2290 = vmul.f32 %v2285, %v2289
    %2291 = vst [vmem:[#allocation14] sm:$0x3] %v2290
    // Predicated region
    $region62: #{tpu_custom_call.1} parent=1 // pred_check
      _
    $region63: #{tpu_custom_call.1} parent=1 // pred_check_branch
      %2293 = sbr.rel (0) target = $region65
    $region64: #{tpu_custom_call.1} parent=1 // pred_region
      %s2295 = ssub.s32 32, 32
      %2296 = vsyncadd [#allocation4], %s2295
      %s2298 = sshll.u32 [#allocation14], 4
      %s2299 = int_to_ptr.vmem [resolvable:$true] %s2298
      %2301 = dma.vmem_to_hbm [thread:$0]  %s2299, 32, %s8, [#allocation4]
    $region65: #{tpu_custom_call.1} parent=1 // pred_fallthru
      _
    // Predicated region
    $region66: #{tpu_custom_call.1} parent=1 // pred_check
      _
    $region67: #{tpu_custom_call.1} parent=1 // pred_check_branch
      %2303 = sbr.rel (0) target = $region69
    $region68: #{tpu_custom_call.1} parent=1 // pred_region
      %2304 = dma.done [#allocation4], 32
    $region69: #{tpu_custom_call.1} parent=1 // pred_fallthru
      _
    %2305 = vsyncpa [#allocation3], 1
    %2306 = vsyncpa [#allocation6], 1
    %2307 = vsyncpa [#allocation9], 1
    %2308 = vsyncpa [#allocation12], 1
    %2309 = vsyncpa [#allocation4], 1

</llo_original>
